<compile_context>
chip_gen: v7x
topology: tpu7x:2x2x1
jax: 0.10.0
libtpu: 0.0.40
codegen_flags: <defaults>
</compile_context>

<pallas_src>
import functools

import jax
import jax.numpy as jnp
from jax.experimental import pallas as pl
from jax.experimental.pallas import tpu as pltpu


# ----------------------------- kernel ---------------------------------------

def _rg_kernel(num_heads, batch, seq,
               x_ref, wqkv_ref, bqkv_ref, wo_ref, wg_ref, wm_ref,
               vec_ref, relb_ref, segq_ref, segt_ref, out_ref):
    x = x_ref[...]                            # [R, E], R = batch*seq
    R, E = x.shape
    B, S, H = batch, seq, num_heads
    mm_dtype = wqkv_ref.dtype                 # f32 or bf16 (matmul operands only)

    vecs = vec_ref[...]                       # [5, E]: gamma, beta, bo, bg, bm
    # Hoisted broadcasts — JAX does not CSE broadcast_in_dim, and gamma/beta
    # are used by BOTH LayerNorm applications.
    gamma = jnp.broadcast_to(vecs[0:1, :], (R, E))
    beta = jnp.broadcast_to(vecs[1:2, :], (R, E))
    bo = jnp.broadcast_to(vecs[2:3, :], (R, E))
    bg = jnp.broadcast_to(vecs[3:4, :], (R, E))
    bm = jnp.broadcast_to(vecs[4:5, :], (R, E))

    def layer_norm(v):
        # PyTorch LayerNorm over the last dim (biased variance), eps=1e-5.
        m = jnp.mean(v, axis=-1, keepdims=True)
        c = v - m
        var = jnp.mean(c * c, axis=-1, keepdims=True)
        return c * jax.lax.rsqrt(var + 1e-5) * gamma + beta

    # ln = LayerNorm(Matrix)
    ln = layer_norm(x)

    # Fused Q/K/V projection: ONE [R, E] @ [E, 3E] matmul.
    qkv = jnp.dot(ln.astype(mm_dtype), wqkv_ref[...],
                  preferred_element_type=jnp.float32) + bqkv_ref[...]     # [R, 3E]

    # Only three width-E lane slices (no per-head slicing anywhere).
    q2 = qkv[:, 0:E]
    k2 = qkv[:, E:2 * E]
    v2 = qkv[:, 2 * E:3 * E]

    # Scores with the head axis implicit: outer product over (query i, key j)
    # per batch element (pure VPU), then ONE matmul with the segment matrix
    # segq[e, h] = scale * [e // dh == h] contracts the dh lanes of each head.
    qb = q2.reshape(B, S, 1, E)               # broadcast q_i over the key axis
    kb = k2.reshape(B, 1, S, E)               # layout-preserving; replicate over i
    prod = qb * kb                            # [B, S(i), S(j), E]
    scores = jnp.dot(prod.reshape(B * S * S, E), segq_ref[...],
                     preferred_element_type=jnp.float32)                  # [B*S*S, H]
    scores = scores.reshape(B, S, S, H) + relb_ref[...][None]             # +[1,S,S,H]

    # Softmax over the key axis (axis 2).  Exact normalization (no approx
    # reciprocal); the reduce is over only S=8 elements.
    scores = scores - jnp.max(scores, axis=2, keepdims=True)
    p = jnp.exp(scores)
    p = p / jnp.sum(p, axis=2, keepdims=True)                             # [B,S,S,H]

    # Expand head probabilities back to lanes with the transposed segment
    # matrix (ONE matmul), weight V on the VPU, reduce over the key axis.
    pe = jnp.dot(p.reshape(B * S * S, H), segt_ref[...],
                 preferred_element_type=jnp.float32).reshape(B, S, S, E)
    attn = jnp.sum(pe * v2.reshape(B, 1, S, E), axis=2)                   # [B, S, E]
    attn2d = attn.reshape(R, E)

    # Output projection of the relation-biased MHA.
    rmha = jnp.dot(attn2d.astype(mm_dtype), wo_ref[...],
                   preferred_element_type=jnp.float32) + bo

    # gate0 = sigmoid(Linear(Matrix));  gate1 = gate0 * rmha + Matrix
    gate0 = jax.nn.sigmoid(jnp.dot(x.astype(mm_dtype), wg_ref[...],
                                   preferred_element_type=jnp.float32) + bg)
    gate1 = gate0 * rmha + x

    # final = gate1 * LayerNorm(sigmoid(Linear(gate1))) + gate1
    mlp = jax.nn.sigmoid(jnp.dot(gate1.astype(mm_dtype), wm_ref[...],
                                 preferred_element_type=jnp.float32) + bm)
    final = gate1 * layer_norm(mlp) + gate1

    out_ref[...] = final.astype(out_ref.dtype)


# ------------------------ one-time parameter packing -------------------------

def pack_rg_params(params, num_heads=8, matmul_dtype=jnp.float32):
    """One-time packing (init-time, NOT in the per-call path)."""
    (gamma, beta, wq, bq, wk, bk, wv, bv, wo, bo, relb, wg, bg, wm, bm) = params
    E = wq.shape[0]
    H = num_heads
    dh = E // H
    scale = 1.0 / (dh ** 0.5)

    wqkv = jnp.concatenate([wq, wk, wv], axis=1).astype(matmul_dtype)   # [E, 3E]
    bqkv = jnp.concatenate([bq, bk, bv], axis=1).astype(jnp.float32)    # [1, 3E]
    vecs = jnp.concatenate([gamma, beta, bo, bg, bm], axis=0).astype(jnp.float32)
    relb_t = jnp.transpose(relb, (1, 2, 0)).astype(jnp.float32)         # [S, S, H]

    # Head-segment matrices: segt[h, h*dh+d] = 1 ; segq = scale * segt.T
    eye_h = jnp.eye(H, dtype=jnp.float32)
    segt = jnp.repeat(eye_h, dh, axis=1)                                # [H, E]
    segq = (segt * scale).T                                             # [E, H]

    return dict(
        wqkv=wqkv, bqkv=bqkv,
        wo=wo.astype(matmul_dtype), wg=wg.astype(matmul_dtype),
        wm=wm.astype(matmul_dtype),
        vecs=vecs, relb=relb_t, segq=segq, segt=segt)


# ----------------------------- wrapper ---------------------------------------

def rg_transformer(matrix, packed, *, num_heads=8, block_batch=None):
    """matrix: [B, S, E] float32; packed: output of pack_rg_params()."""
    B, S, E = matrix.shape
    if block_batch is None:
        block_batch = B
    assert B % block_batch == 0
    grid_b = B // block_batch
    R = B * S
    rb = block_batch * S

    x2d = matrix.reshape(R, E)   # free metadata reshape in XLA (row-major)

    out2d = pl.pallas_call(
        functools.partial(_rg_kernel, num_heads, block_batch, S),
        out_shape=jax.ShapeDtypeStruct((R, E), matrix.dtype),
        grid=(grid_b,),
        in_specs=[
            pl.BlockSpec((rb, E), lambda g: (g, 0)),                 # x
            pl.BlockSpec((E, 3 * E), lambda g: (0, 0)),              # wqkv
            pl.BlockSpec((1, 3 * E), lambda g: (0, 0)),              # bqkv
            pl.BlockSpec((E, E), lambda g: (0, 0)),                  # wo
            pl.BlockSpec((E, E), lambda g: (0, 0)),                  # wg
            pl.BlockSpec((E, E), lambda g: (0, 0)),                  # wm
            pl.BlockSpec((5, E), lambda g: (0, 0)),                  # vecs
            pl.BlockSpec((S, S, num_heads), lambda g: (0, 0, 0)),    # relation bias
            pl.BlockSpec((E, num_heads), lambda g: (0, 0)),          # segq
            pl.BlockSpec((num_heads, E), lambda g: (0, 0)),          # segt
        ],
        out_specs=pl.BlockSpec((rb, E), lambda g: (g, 0)),
        compiler_params=pltpu.CompilerParams(
            dimension_semantics=("parallel",)),   # shards batch blocks on v7x
    )(x2d, packed["wqkv"], packed["bqkv"], packed["wo"], packed["wg"],
      packed["wm"], packed["vecs"], packed["relb"], packed["segq"],
      packed["segt"])

    return out2d.reshape(B, S, E)


# ------------------------- pure-JAX reference ---------------------------------

def rg_transformer_ref(matrix, params, num_heads=8):
    (gamma, beta, wq, bq, wk, bk, wv, bv, wo, bo, relb, wg, bg, wm, bm) = params
    B, S, E = matrix.shape
    dh = E // num_heads

    def ln_fn(x):
        m = jnp.mean(x, axis=-1, keepdims=True)
        v = jnp.mean((x - m) ** 2, axis=-1, keepdims=True)
        return (x - m) / jnp.sqrt(v + 1e-5) * gamma + beta

    ln = ln_fn(matrix)
    q = ln @ wq + bq
    k = ln @ wk + bk
    v = ln @ wv + bv
    q = q.reshape(B, S, num_heads, dh).transpose(0, 2, 1, 3)
    k = k.reshape(B, S, num_heads, dh).transpose(0, 2, 1, 3)
    v = v.reshape(B, S, num_heads, dh).transpose(0, 2, 1, 3)
    scores = jnp.einsum("bhqd,bhkd->bhqk", q, k) / (dh ** 0.5) + relb[None]
    p = jax.nn.softmax(scores, axis=-1)
    attn = jnp.einsum("bhqk,bhkd->bhqd", p, v).transpose(0, 2, 1, 3).reshape(B, S, E)
    rmha = attn @ wo + bo
    gate0 = jax.nn.sigmoid(matrix @ wg + bg)
    gate1 = gate0 * rmha + matrix
    mlp = jax.nn.sigmoid(gate1 @ wm + bm)
    return gate1 * ln_fn(mlp) + gate1


# ----------------------------- main -------------------------------------------

if __name__ == "__main__":
    B, S, E, H = 2, 8, 32, 8   # batch, game_total, shape1 (embed), heads

    key = jax.random.PRNGKey(0)
    ks = jax.random.split(key, 8)

    def linear_init(k, fan_in, fan_out):
        bound = 1.0 / (fan_in ** 0.5)
        kw, kb = jax.random.split(k)
        w = jax.random.uniform(kw, (fan_in, fan_out), jnp.float32, -bound, bound)
        b = jax.random.uniform(kb, (1, fan_out), jnp.float32, -bound, bound)
        return w, b

    gamma = jnp.ones((1, E), jnp.float32)
    beta = jnp.zeros((1, E), jnp.float32)
    wq, bq = linear_init(ks[0], E, E)
    wk, bk = linear_init(ks[1], E, E)
    wv, bv = linear_init(ks[2], E, E)
    wo, bo = linear_init(ks[3], E, E)
    relb = 0.02 * jax.random.normal(ks[4], (H, S, S), jnp.float32)
    wg, bg = linear_init(ks[5], E, E)
    wm, bm = linear_init(ks[6], E, E)

    params = (gamma, beta, wq, bq, wk, bk, wv, bv, wo, bo, relb, wg, bg, wm, bm)
    matrix = jax.random.normal(ks[7], (B, S, E), jnp.float32)

    ref = rg_transformer_ref(matrix, params, num_heads=H)

    # ---- f32-matmul path, single invocation (grid collapses to 1). ----------
    packed_f32 = pack_rg_params(params, num_heads=H, matmul_dtype=jnp.float32)
    fwd = jax.jit(functools.partial(rg_transformer, num_heads=H, block_batch=B))
    out = jax.block_until_ready(fwd(matrix, packed_f32))
    assert out.shape == (B, S, E)
    # Exact softmax now; remaining tolerance only covers f32 matmul pass
    # decomposition differences between the MXU and the XLA reference dots.
    assert jnp.allclose(out, ref, rtol=2e-3, atol=2e-3), "f32 kernel mismatch"

    # ---- same kernel with a parallel batch grid (uses both TCs on v7x). -----
    fwd_grid = jax.jit(functools.partial(rg_transformer, num_heads=H, block_batch=1))
    out_grid = jax.block_until_ready(fwd_grid(matrix, packed_f32))
    assert jnp.allclose(out_grid, ref, rtol=2e-3, atol=2e-3), "gridded kernel mismatch"

    # ---- bf16 matmul operands (v5e/v6e recommendation); elementwise stays f32.
    packed_bf16 = pack_rg_params(params, num_heads=H, matmul_dtype=jnp.bfloat16)
    out_bf16 = jax.block_until_ready(fwd(matrix, packed_bf16))
    assert bool(jnp.all(jnp.isfinite(out_bf16)))
    assert float(jnp.max(jnp.abs(out_bf16 - ref))) < 0.25, "bf16 kernel diverged"

    print("KERNEL_OK")
</pallas_src>

<mosaic_0001>
module attributes {stable_mosaic.version = 11 : i64} {
  func.func @_rg_kernel(%arg0: i32, %arg1: memref<16x32xf32, #tpu.memory_space<vmem>>, %arg2: memref<32x96xf32, #tpu.memory_space<vmem>>, %arg3: memref<1x96xf32, #tpu.memory_space<vmem>>, %arg4: memref<32x32xf32, #tpu.memory_space<vmem>>, %arg5: memref<32x32xf32, #tpu.memory_space<vmem>>, %arg6: memref<32x32xf32, #tpu.memory_space<vmem>>, %arg7: memref<5x32xf32, #tpu.memory_space<vmem>>, %arg8: memref<8x8x8xf32, #tpu.memory_space<vmem>>, %arg9: memref<32x8xf32, #tpu.memory_space<vmem>>, %arg10: memref<8x32xf32, #tpu.memory_space<vmem>>, %arg11: memref<16x32xf32, #tpu.memory_space<vmem>>) attributes {dimension_semantics = [#tpu.dimension_semantics<parallel>], iteration_bounds = array<i64: 1>, scalar_prefetch = 0 : i64, scratch_operands = 0 : i64, tpu.core_type = #tpu.core_type<tc>, window_params = [{transform_indices = @transform_0, window_bounds = array<i64: 16, 32>}, {pipeline_mode = #tpu.pipeline_mode<synchronous>, transform_indices = @transform_1, window_bounds = array<i64: 32, 96>}, {pipeline_mode = #tpu.pipeline_mode<synchronous>, transform_indices = @transform_2, window_bounds = array<i64: 1, 96>}, {pipeline_mode = #tpu.pipeline_mode<synchronous>, transform_indices = @transform_3, window_bounds = array<i64: 32, 32>}, {pipeline_mode = #tpu.pipeline_mode<synchronous>, transform_indices = @transform_4, window_bounds = array<i64: 32, 32>}, {pipeline_mode = #tpu.pipeline_mode<synchronous>, transform_indices = @transform_5, window_bounds = array<i64: 32, 32>}, {pipeline_mode = #tpu.pipeline_mode<synchronous>, transform_indices = @transform_6, window_bounds = array<i64: 5, 32>}, {pipeline_mode = #tpu.pipeline_mode<synchronous>, transform_indices = @transform_7, window_bounds = array<i64: 8, 8, 8>}, {pipeline_mode = #tpu.pipeline_mode<synchronous>, transform_indices = @transform_8, window_bounds = array<i64: 32, 8>}, {pipeline_mode = #tpu.pipeline_mode<synchronous>, transform_indices = @transform_9, window_bounds = array<i64: 8, 32>}, {transform_indices = @transform_10, window_bounds = array<i64: 16, 32>}]} {
    %c0 = arith.constant 0 : index
    %c0_0 = arith.constant 0 : index
    %0 = vector.load %arg1[%c0, %c0_0] : memref<16x32xf32, #tpu.memory_space<vmem>>, vector<16x32xf32>
    %c0_1 = arith.constant 0 : index
    %c0_2 = arith.constant 0 : index
    %1 = vector.load %arg7[%c0_1, %c0_2] : memref<5x32xf32, #tpu.memory_space<vmem>>, vector<5x32xf32>
    %2 = vector.extract_strided_slice %1 {offsets = [0, 0], sizes = [1, 32], strides = [1, 1]} : vector<5x32xf32> to vector<1x32xf32>
    %3 = vector.shape_cast %2 : vector<1x32xf32> to vector<1x32xf32>
    %4 = vector.broadcast %3 : vector<1x32xf32> to vector<16x32xf32>
    %5 = vector.extract_strided_slice %1 {offsets = [1, 0], sizes = [1, 32], strides = [1, 1]} : vector<5x32xf32> to vector<1x32xf32>
    %6 = vector.shape_cast %5 : vector<1x32xf32> to vector<1x32xf32>
    %7 = vector.broadcast %6 : vector<1x32xf32> to vector<16x32xf32>
    %8 = vector.extract_strided_slice %1 {offsets = [2, 0], sizes = [1, 32], strides = [1, 1]} : vector<5x32xf32> to vector<1x32xf32>
    %9 = vector.shape_cast %8 : vector<1x32xf32> to vector<1x32xf32>
    %10 = vector.broadcast %9 : vector<1x32xf32> to vector<16x32xf32>
    %11 = vector.extract_strided_slice %1 {offsets = [3, 0], sizes = [1, 32], strides = [1, 1]} : vector<5x32xf32> to vector<1x32xf32>
    %12 = vector.shape_cast %11 : vector<1x32xf32> to vector<1x32xf32>
    %13 = vector.broadcast %12 : vector<1x32xf32> to vector<16x32xf32>
    %14 = vector.extract_strided_slice %1 {offsets = [4, 0], sizes = [1, 32], strides = [1, 1]} : vector<5x32xf32> to vector<1x32xf32>
    %15 = vector.shape_cast %14 : vector<1x32xf32> to vector<1x32xf32>
    %16 = vector.broadcast %15 : vector<1x32xf32> to vector<16x32xf32>
    %cst = arith.constant dense<0.000000e+00> : vector<16xf32>
    %17 = vector.multi_reduction <add>, %0, %cst [1] : vector<16x32xf32> to vector<16xf32>
    %18 = vector.shape_cast %17 : vector<16xf32> to vector<16x1xf32>
    %cst_3 = arith.constant 3.200000e+01 : f32
    %19 = vector.broadcast %cst_3 : f32 to vector<16x1xf32>
    %20 = arith.divf %18, %19 : vector<16x1xf32>
    %21 = vector.broadcast %20 : vector<16x1xf32> to vector<16x32xf32>
    %22 = arith.subf %0, %21 : vector<16x32xf32>
    %23 = arith.mulf %22, %22 : vector<16x32xf32>
    %cst_4 = arith.constant dense<0.000000e+00> : vector<16xf32>
    %24 = vector.multi_reduction <add>, %23, %cst_4 [1] : vector<16x32xf32> to vector<16xf32>
    %25 = vector.shape_cast %24 : vector<16xf32> to vector<16x1xf32>
    %cst_5 = arith.constant 3.200000e+01 : f32
    %26 = vector.broadcast %cst_5 : f32 to vector<16x1xf32>
    %27 = arith.divf %25, %26 : vector<16x1xf32>
    %cst_6 = arith.constant 9.99999974E-6 : f32
    %28 = vector.broadcast %cst_6 : f32 to vector<16x1xf32>
    %29 = arith.addf %27, %28 : vector<16x1xf32>
    %30 = math.rsqrt %29 : vector<16x1xf32>
    %31 = vector.broadcast %30 : vector<16x1xf32> to vector<16x32xf32>
    %32 = arith.mulf %22, %31 : vector<16x32xf32>
    %33 = arith.mulf %32, %4 : vector<16x32xf32>
    %34 = arith.addf %33, %7 : vector<16x32xf32>
    %c0_7 = arith.constant 0 : index
    %c0_8 = arith.constant 0 : index
    %35 = vector.load %arg2[%c0_7, %c0_8] : memref<32x96xf32, #tpu.memory_space<vmem>>, vector<32x96xf32>
    %cst_9 = arith.constant dense<0.000000e+00> : vector<16x96xf32>
    %36 = tpu.matmul %34, %35, %cst_9 {dimension_numbers = #tpu.dot_dimension_numbers<[1], [0], [0], [1], [0, 0, 1, 1], [], []>} : vector<16x32xf32>, vector<32x96xf32>, vector<16x96xf32> -> vector<16x96xf32>
    %c0_10 = arith.constant 0 : index
    %c0_11 = arith.constant 0 : index
    %37 = vector.load %arg3[%c0_10, %c0_11] : memref<1x96xf32, #tpu.memory_space<vmem>>, vector<1x96xf32>
    %38 = vector.broadcast %37 : vector<1x96xf32> to vector<16x96xf32>
    %39 = arith.addf %36, %38 : vector<16x96xf32>
    %40 = vector.extract_strided_slice %39 {offsets = [0, 0], sizes = [16, 32], strides = [1, 1]} : vector<16x96xf32> to vector<16x32xf32>
    %41 = vector.extract_strided_slice %39 {offsets = [0, 32], sizes = [16, 32], strides = [1, 1]} : vector<16x96xf32> to vector<16x32xf32>
    %42 = vector.extract_strided_slice %39 {offsets = [0, 64], sizes = [16, 32], strides = [1, 1]} : vector<16x96xf32> to vector<16x32xf32>
    %43 = vector.shape_cast %40 : vector<16x32xf32> to vector<2x8x1x32xf32>
    %44 = vector.shape_cast %41 : vector<16x32xf32> to vector<2x1x8x32xf32>
    %45 = vector.broadcast %43 : vector<2x8x1x32xf32> to vector<2x8x8x32xf32>
    %46 = vector.broadcast %44 : vector<2x1x8x32xf32> to vector<2x8x8x32xf32>
    %47 = arith.mulf %45, %46 : vector<2x8x8x32xf32>
    %48 = vector.shape_cast %47 : vector<2x8x8x32xf32> to vector<128x32xf32>
    %c0_12 = arith.constant 0 : index
    %c0_13 = arith.constant 0 : index
    %49 = vector.load %arg9[%c0_12, %c0_13] : memref<32x8xf32, #tpu.memory_space<vmem>>, vector<32x8xf32>
    %cst_14 = arith.constant dense<0.000000e+00> : vector<128x8xf32>
    %50 = tpu.matmul %48, %49, %cst_14 {dimension_numbers = #tpu.dot_dimension_numbers<[1], [0], [0], [1], [0, 0, 1, 1], [], []>} : vector<128x32xf32>, vector<32x8xf32>, vector<128x8xf32> -> vector<128x8xf32>
    %51 = vector.shape_cast %50 : vector<128x8xf32> to vector<2x8x8x8xf32>
    %c0_15 = arith.constant 0 : index
    %c0_16 = arith.constant 0 : index
    %c0_17 = arith.constant 0 : index
    %52 = vector.load %arg8[%c0_15, %c0_16, %c0_17] : memref<8x8x8xf32, #tpu.memory_space<vmem>>, vector<8x8x8xf32>
    %53 = vector.shape_cast %52 : vector<8x8x8xf32> to vector<1x8x8x8xf32>
    %54 = vector.broadcast %53 : vector<1x8x8x8xf32> to vector<2x8x8x8xf32>
    %55 = arith.addf %51, %54 : vector<2x8x8x8xf32>
    %cst_18 = arith.constant dense<0xFF800000> : vector<2x8x8xf32>
    %56 = vector.multi_reduction <maximumf>, %55, %cst_18 [2] : vector<2x8x8x8xf32> to vector<2x8x8xf32>
    %57 = vector.shape_cast %56 : vector<2x8x8xf32> to vector<2x8x1x8xf32>
    %58 = vector.broadcast %57 : vector<2x8x1x8xf32> to vector<2x8x8x8xf32>
    %59 = arith.subf %55, %58 : vector<2x8x8x8xf32>
    %60 = math.exp %59 : vector<2x8x8x8xf32>
    %cst_19 = arith.constant dense<0.000000e+00> : vector<2x8x8xf32>
    %61 = vector.multi_reduction <add>, %60, %cst_19 [2] : vector<2x8x8x8xf32> to vector<2x8x8xf32>
    %62 = vector.shape_cast %61 : vector<2x8x8xf32> to vector<2x8x1x8xf32>
    %63 = vector.broadcast %62 : vector<2x8x1x8xf32> to vector<2x8x8x8xf32>
    %64 = arith.divf %60, %63 : vector<2x8x8x8xf32>
    %65 = vector.shape_cast %64 : vector<2x8x8x8xf32> to vector<128x8xf32>
    %c0_20 = arith.constant 0 : index
    %c0_21 = arith.constant 0 : index
    %66 = vector.load %arg10[%c0_20, %c0_21] : memref<8x32xf32, #tpu.memory_space<vmem>>, vector<8x32xf32>
    %cst_22 = arith.constant dense<0.000000e+00> : vector<128x32xf32>
    %67 = tpu.matmul %65, %66, %cst_22 {dimension_numbers = #tpu.dot_dimension_numbers<[1], [0], [0], [1], [0, 0, 1, 1], [], []>} : vector<128x8xf32>, vector<8x32xf32>, vector<128x32xf32> -> vector<128x32xf32>
    %68 = vector.shape_cast %67 : vector<128x32xf32> to vector<2x8x8x32xf32>
    %69 = vector.shape_cast %42 : vector<16x32xf32> to vector<2x1x8x32xf32>
    %70 = vector.broadcast %69 : vector<2x1x8x32xf32> to vector<2x8x8x32xf32>
    %71 = arith.mulf %68, %70 : vector<2x8x8x32xf32>
    %cst_23 = arith.constant dense<0.000000e+00> : vector<2x8x32xf32>
    %72 = vector.multi_reduction <add>, %71, %cst_23 [2] : vector<2x8x8x32xf32> to vector<2x8x32xf32>
    %73 = vector.shape_cast %72 : vector<2x8x32xf32> to vector<16x32xf32>
    %c0_24 = arith.constant 0 : index
    %c0_25 = arith.constant 0 : index
    %74 = vector.load %arg4[%c0_24, %c0_25] : memref<32x32xf32, #tpu.memory_space<vmem>>, vector<32x32xf32>
    %cst_26 = arith.constant dense<0.000000e+00> : vector<16x32xf32>
    %75 = tpu.matmul %73, %74, %cst_26 {dimension_numbers = #tpu.dot_dimension_numbers<[1], [0], [0], [1], [0, 0, 1, 1], [], []>} : vector<16x32xf32>, vector<32x32xf32>, vector<16x32xf32> -> vector<16x32xf32>
    %76 = arith.addf %75, %10 : vector<16x32xf32>
    %c0_27 = arith.constant 0 : index
    %c0_28 = arith.constant 0 : index
    %77 = vector.load %arg5[%c0_27, %c0_28] : memref<32x32xf32, #tpu.memory_space<vmem>>, vector<32x32xf32>
    %cst_29 = arith.constant dense<0.000000e+00> : vector<16x32xf32>
    %78 = tpu.matmul %0, %77, %cst_29 {dimension_numbers = #tpu.dot_dimension_numbers<[1], [0], [0], [1], [0, 0, 1, 1], [], []>} : vector<16x32xf32>, vector<32x32xf32>, vector<16x32xf32> -> vector<16x32xf32>
    %79 = arith.addf %78, %13 : vector<16x32xf32>
    %80 = arith.negf %79 : vector<16x32xf32>
    %81 = math.exp %80 : vector<16x32xf32>
    %cst_30 = arith.constant 1.000000e+00 : f32
    %82 = vector.broadcast %cst_30 : f32 to vector<16x32xf32>
    %83 = arith.addf %82, %81 : vector<16x32xf32>
    %84 = arith.divf %82, %83 : vector<16x32xf32>
    %85 = arith.mulf %84, %76 : vector<16x32xf32>
    %86 = arith.addf %85, %0 : vector<16x32xf32>
    %c0_31 = arith.constant 0 : index
    %c0_32 = arith.constant 0 : index
    %87 = vector.load %arg6[%c0_31, %c0_32] : memref<32x32xf32, #tpu.memory_space<vmem>>, vector<32x32xf32>
    %cst_33 = arith.constant dense<0.000000e+00> : vector<16x32xf32>
    %88 = tpu.matmul %86, %87, %cst_33 {dimension_numbers = #tpu.dot_dimension_numbers<[1], [0], [0], [1], [0, 0, 1, 1], [], []>} : vector<16x32xf32>, vector<32x32xf32>, vector<16x32xf32> -> vector<16x32xf32>
    %89 = arith.addf %88, %16 : vector<16x32xf32>
    %90 = arith.negf %89 : vector<16x32xf32>
    %91 = math.exp %90 : vector<16x32xf32>
    %cst_34 = arith.constant 1.000000e+00 : f32
    %92 = vector.broadcast %cst_34 : f32 to vector<16x32xf32>
    %93 = arith.addf %92, %91 : vector<16x32xf32>
    %94 = arith.divf %92, %93 : vector<16x32xf32>
    %cst_35 = arith.constant dense<0.000000e+00> : vector<16xf32>
    %95 = vector.multi_reduction <add>, %94, %cst_35 [1] : vector<16x32xf32> to vector<16xf32>
    %96 = vector.shape_cast %95 : vector<16xf32> to vector<16x1xf32>
    %cst_36 = arith.constant 3.200000e+01 : f32
    %97 = vector.broadcast %cst_36 : f32 to vector<16x1xf32>
    %98 = arith.divf %96, %97 : vector<16x1xf32>
    %99 = vector.broadcast %98 : vector<16x1xf32> to vector<16x32xf32>
    %100 = arith.subf %94, %99 : vector<16x32xf32>
    %101 = arith.mulf %100, %100 : vector<16x32xf32>
    %cst_37 = arith.constant dense<0.000000e+00> : vector<16xf32>
    %102 = vector.multi_reduction <add>, %101, %cst_37 [1] : vector<16x32xf32> to vector<16xf32>
    %103 = vector.shape_cast %102 : vector<16xf32> to vector<16x1xf32>
    %cst_38 = arith.constant 3.200000e+01 : f32
    %104 = vector.broadcast %cst_38 : f32 to vector<16x1xf32>
    %105 = arith.divf %103, %104 : vector<16x1xf32>
    %cst_39 = arith.constant 9.99999974E-6 : f32
    %106 = vector.broadcast %cst_39 : f32 to vector<16x1xf32>
    %107 = arith.addf %105, %106 : vector<16x1xf32>
    %108 = math.rsqrt %107 : vector<16x1xf32>
    %109 = vector.broadcast %108 : vector<16x1xf32> to vector<16x32xf32>
    %110 = arith.mulf %100, %109 : vector<16x32xf32>
    %111 = arith.mulf %110, %4 : vector<16x32xf32>
    %112 = arith.addf %111, %7 : vector<16x32xf32>
    %113 = arith.mulf %86, %112 : vector<16x32xf32>
    %114 = arith.addf %113, %86 : vector<16x32xf32>
    %c0_40 = arith.constant 0 : index
    %c0_41 = arith.constant 0 : index
    %115 = vector.load %arg11[%c0_40, %c0_41] : memref<16x32xf32, #tpu.memory_space<vmem>>, vector<16x32xf32>
    tpu.vector_store %arg11[%c0_40, %c0_41], %114 {strides = array<i32>} : memref<16x32xf32, #tpu.memory_space<vmem>>, vector<16x32xf32>,
    return
  }
  func.func @transform_0(%arg0: i32) -> (i32, i32) {
    %c0_i32 = arith.constant 0 : i32
    %c0_i32_0 = arith.constant 0 : i32
    return %arg0, %c0_i32 : i32, i32
  }
  func.func @transform_1(%arg0: i32) -> (i32, i32) {
    %c0_i32 = arith.constant 0 : i32
    %c0_i32_0 = arith.constant 0 : i32
    %c0_i32_1 = arith.constant 0 : i32
    return %c0_i32, %c0_i32_0 : i32, i32
  }
  func.func @transform_2(%arg0: i32) -> (i32, i32) {
    %c0_i32 = arith.constant 0 : i32
    %c0_i32_0 = arith.constant 0 : i32
    %c0_i32_1 = arith.constant 0 : i32
    return %c0_i32, %c0_i32_0 : i32, i32
  }
  func.func @transform_3(%arg0: i32) -> (i32, i32) {
    %c0_i32 = arith.constant 0 : i32
    %c0_i32_0 = arith.constant 0 : i32
    %c0_i32_1 = arith.constant 0 : i32
    return %c0_i32, %c0_i32_0 : i32, i32
  }
  func.func @transform_4(%arg0: i32) -> (i32, i32) {
    %c0_i32 = arith.constant 0 : i32
    %c0_i32_0 = arith.constant 0 : i32
    %c0_i32_1 = arith.constant 0 : i32
    return %c0_i32, %c0_i32_0 : i32, i32
  }
  func.func @transform_5(%arg0: i32) -> (i32, i32) {
    %c0_i32 = arith.constant 0 : i32
    %c0_i32_0 = arith.constant 0 : i32
    %c0_i32_1 = arith.constant 0 : i32
    return %c0_i32, %c0_i32_0 : i32, i32
  }
  func.func @transform_6(%arg0: i32) -> (i32, i32) {
    %c0_i32 = arith.constant 0 : i32
    %c0_i32_0 = arith.constant 0 : i32
    %c0_i32_1 = arith.constant 0 : i32
    return %c0_i32, %c0_i32_0 : i32, i32
  }
  func.func @transform_7(%arg0: i32) -> (i32, i32, i32) {
    %c0_i32 = arith.constant 0 : i32
    %c0_i32_0 = arith.constant 0 : i32
    %c0_i32_1 = arith.constant 0 : i32
    %c0_i32_2 = arith.constant 0 : i32
    return %c0_i32, %c0_i32_0, %c0_i32_1 : i32, i32, i32
  }
  func.func @transform_8(%arg0: i32) -> (i32, i32) {
    %c0_i32 = arith.constant 0 : i32
    %c0_i32_0 = arith.constant 0 : i32
    %c0_i32_1 = arith.constant 0 : i32
    return %c0_i32, %c0_i32_0 : i32, i32
  }
  func.func @transform_9(%arg0: i32) -> (i32, i32) {
    %c0_i32 = arith.constant 0 : i32
    %c0_i32_0 = arith.constant 0 : i32
    %c0_i32_1 = arith.constant 0 : i32
    return %c0_i32, %c0_i32_0 : i32, i32
  }
  func.func @transform_10(%arg0: i32) -> (i32, i32) {
    %c0_i32 = arith.constant 0 : i32
    %c0_i32_0 = arith.constant 0 : i32
    return %arg0, %c0_i32 : i32, i32
  }
}

</mosaic_0001>

<llo_original>
// kernel: rg_transformer.1
$region0: #{rg_transformer.1}
  #allocation0 [shape = 'u32[]', space=smem, size = 0x4, offset = 0x4, fixed_abs, tag = 'smem constant byte address 0x4 - core index']
  #allocation1 [shape = 'u32[144,128]{1,0:T(1,128)}', space=vmem, size = 0x12000, scoped, tag = 'internal scratch']
  %s0 = inlined_call_operand.hbm [shape: f32[16,32], index: 0, kind: input, shape index: {}]
  %s1 = inlined_call_operand.vmem [shape: f32[32,96], index: 1, kind: input, shape index: {}]
  %s2 = inlined_call_operand.vmem [shape: f32[1,96], index: 2, kind: input, shape index: {}]
  %s3 = inlined_call_operand.vmem [shape: f32[32,32], index: 3, kind: input, shape index: {}]
  %s4 = inlined_call_operand.hbm [shape: f32[32,32], index: 4, kind: input, shape index: {}]
  %s5 = inlined_call_operand.hbm [shape: f32[32,32], index: 5, kind: input, shape index: {}]
  %s6 = inlined_call_operand.hbm [shape: f32[5,32], index: 6, kind: input, shape index: {}]
  %s7 = inlined_call_operand.hbm [shape: f32[8,8,8], index: 7, kind: input, shape index: {}]
  %s8 = inlined_call_operand.vmem [shape: f32[32,8], index: 8, kind: input, shape index: {}]
  %s9 = inlined_call_operand.hbm [shape: f32[8,32], index: 9, kind: input, shape index: {}]
  %s10 = inlined_call_operand.hbm [shape: f32[16,32], index: 10, kind: output, shape index: {}]
  %s11 = sld [smem:[#allocation0]]
  $region74: #{rg_transformer.1} parent=0
    _
  %s13 = ssub.s32 1, %s11
  %s14 = scalar_select 0, %s13, %s11
  $region1: #{rg_transformer.1} parent=0
    #allocation2 [shape = 'u8[8192]{0}', space=vmem, size = 0x2000, scoped, tag = 'input window, operand 0, single buffered']
    #allocation3 [shape = 's32[1]{0}', space=sflag, size = 0x4, scoped, tag = 'scoped memory for rg_transformer.1']
    #allocation4 [shape = 's32[1]{0}', space=sflag, size = 0x4, scoped, tag = 'scoped memory for rg_transformer.1']
    #allocation5 [shape = 'u8[16384]{0}', space=vmem, size = 0x4000, scoped, tag = 'input window, operand 4, single buffered']
    #allocation6 [shape = 's32[1]{0}', space=sflag, size = 0x4, scoped, tag = 'scoped memory for rg_transformer.1']
    #allocation7 [shape = 'u8[16384]{0}', space=vmem, size = 0x4000, scoped, tag = 'input window, operand 5, single buffered']
    #allocation8 [shape = 'u8[4096]{0}', space=vmem, size = 0x1000, scoped, tag = 'input window, operand 6, single buffered']
    #allocation9 [shape = 's32[1]{0}', space=sflag, size = 0x4, scoped, tag = 'scoped memory for rg_transformer.1']
    #allocation10 [shape = 'u8[32768]{0}', space=vmem, size = 0x8000, scoped, tag = 'input window, operand 7, single buffered']
    #allocation11 [shape = 'u8[4096]{0}', space=vmem, size = 0x1000, scoped, tag = 'input window, operand 9, single buffered']
    #allocation12 [shape = 's32[1]{0}', space=sflag, size = 0x4, scoped, tag = 'scoped memory for rg_transformer.1']
    #allocation13 [shape = 'u8[8192]{0}', space=vmem, size = 0x2000, scoped, tag = 'output window, operand 0, single buffered']
    %15 = vsyncpa [#allocation3], 0
    %16 = vsyncpa [#allocation6], 0
    %17 = vsyncpa [#allocation9], 0
    %18 = vsyncpa [#allocation12], 0
    %19 = vsyncpa [#allocation4], 0
    // Predicated region
    $region2: #{rg_transformer.1} parent=1 // pred_check
      _
    $region3: #{rg_transformer.1} parent=1 // pred_check_branch
      %21 = sbr.rel (0) target = $region5
    $region4: #{rg_transformer.1} parent=1 // pred_region
      %s23 = ssub.s32 256, 256
      %24 = vsyncadd [#allocation3], %s23
      %s25 = sshll.u32 [#allocation2], 4
      %s26 = int_to_ptr.vmem [resolvable:$true] %s25
      %31 = dma.hbm_to_vmem [thread:$0]  %s0, 256, %s26, [#allocation3], 128, 128, 8
    $region5: #{rg_transformer.1} parent=1 // pred_fallthru
      _
    // Predicated region
    $region6: #{rg_transformer.1} parent=1 // pred_check
      _
    $region7: #{rg_transformer.1} parent=1 // pred_check_branch
      %33 = sbr.rel (0) target = $region9
    $region8: #{rg_transformer.1} parent=1 // pred_region
      _
    $region9: #{rg_transformer.1} parent=1 // pred_fallthru
      _
    // Predicated region
    $region10: #{rg_transformer.1} parent=1 // pred_check
      _
    $region11: #{rg_transformer.1} parent=1 // pred_check_branch
      %35 = sbr.rel (0) target = $region13
    $region12: #{rg_transformer.1} parent=1 // pred_region
      _
    $region13: #{rg_transformer.1} parent=1 // pred_fallthru
      _
    // Predicated region
    $region14: #{rg_transformer.1} parent=1 // pred_check
      _
    $region15: #{rg_transformer.1} parent=1 // pred_check_branch
      %37 = sbr.rel (0) target = $region17
    $region16: #{rg_transformer.1} parent=1 // pred_region
      _
    $region17: #{rg_transformer.1} parent=1 // pred_fallthru
      _
    // Predicated region
    $region18: #{rg_transformer.1} parent=1 // pred_check
      _
    $region19: #{rg_transformer.1} parent=1 // pred_check_branch
      %39 = sbr.rel (0) target = $region21
    $region20: #{rg_transformer.1} parent=1 // pred_region
      %s41 = ssub.s32 512, 512
      %42 = vsyncadd [#allocation6], %s41
      %s43 = sshll.u32 [#allocation5], 4
      %s44 = int_to_ptr.vmem [resolvable:$true] %s43
      %49 = dma.hbm_to_vmem [thread:$0]  %s4, 512, %s44, [#allocation6], 128, 128, 8
    $region21: #{rg_transformer.1} parent=1 // pred_fallthru
      _
    // Predicated region
    $region22: #{rg_transformer.1} parent=1 // pred_check
      _
    $region23: #{rg_transformer.1} parent=1 // pred_check_branch
      %51 = sbr.rel (0) target = $region25
    $region24: #{rg_transformer.1} parent=1 // pred_region
      %s53 = ssub.s32 512, 512
      %54 = vsyncadd [#allocation6], %s53
      %s55 = sshll.u32 [#allocation7], 4
      %s56 = int_to_ptr.vmem [resolvable:$true] %s55
      %61 = dma.hbm_to_vmem [thread:$0]  %s5, 512, %s56, [#allocation6], 128, 128, 8
    $region25: #{rg_transformer.1} parent=1 // pred_fallthru
      _
    // Predicated region
    $region26: #{rg_transformer.1} parent=1 // pred_check
      _
    $region27: #{rg_transformer.1} parent=1 // pred_check_branch
      %63 = sbr.rel (0) target = $region29
    $region28: #{rg_transformer.1} parent=1 // pred_region
      %s65 = ssub.s32 128, 128
      %66 = vsyncadd [#allocation9], %s65
      %s68 = sshll.u32 [#allocation8], 4
      %s69 = int_to_ptr.vmem [resolvable:$true] %s68
      %71 = dma.hbm_to_vmem [thread:$0]  %s6, 128, %s69, [#allocation9]
    $region29: #{rg_transformer.1} parent=1 // pred_fallthru
      _
    // Predicated region
    $region30: #{rg_transformer.1} parent=1 // pred_check
      _
    $region31: #{rg_transformer.1} parent=1 // pred_check_branch
      %73 = sbr.rel (0) target = $region33
    $region32: #{rg_transformer.1} parent=1 // pred_region
      %s75 = ssub.s32 1024, 1024
      %76 = vsyncadd [#allocation9], %s75
      %s77 = sshll.u32 [#allocation10], 4
      %s78 = int_to_ptr.vmem [resolvable:$true] %s77
      %83 = dma.hbm_to_vmem [thread:$0]  %s7, 1024, %s78, [#allocation9], 128, 128, 8
    $region33: #{rg_transformer.1} parent=1 // pred_fallthru
      _
    // Predicated region
    $region34: #{rg_transformer.1} parent=1 // pred_check
      _
    $region35: #{rg_transformer.1} parent=1 // pred_check_branch
      %85 = sbr.rel (0) target = $region37
    $region36: #{rg_transformer.1} parent=1 // pred_region
      _
    $region37: #{rg_transformer.1} parent=1 // pred_fallthru
      _
    // Predicated region
    $region38: #{rg_transformer.1} parent=1 // pred_check
      _
    $region39: #{rg_transformer.1} parent=1 // pred_check_branch
      %87 = sbr.rel (0) target = $region41
    $region40: #{rg_transformer.1} parent=1 // pred_region
      %s89 = ssub.s32 128, 128
      %90 = vsyncadd [#allocation12], %s89
      %s92 = sshll.u32 [#allocation11], 4
      %s93 = int_to_ptr.vmem [resolvable:$true] %s92
      %95 = dma.hbm_to_vmem [thread:$0]  %s9, 128, %s93, [#allocation12]
    $region41: #{rg_transformer.1} parent=1 // pred_fallthru
      _
    // Predicated region
    $region42: #{rg_transformer.1} parent=1 // pred_check
      _
    $region43: #{rg_transformer.1} parent=1 // pred_check_branch
      %97 = sbr.rel (0) target = $region45
    $region44: #{rg_transformer.1} parent=1 // pred_region
      %98 = dma.done [#allocation3], 256
    $region45: #{rg_transformer.1} parent=1 // pred_fallthru
      _
    // Predicated region
    $region46: #{rg_transformer.1} parent=1 // pred_check
      _
    $region47: #{rg_transformer.1} parent=1 // pred_check_branch
      %100 = sbr.rel (0) target = $region49
    $region48: #{rg_transformer.1} parent=1 // pred_region
      %101 = dma.done [#allocation6], 512
    $region49: #{rg_transformer.1} parent=1 // pred_fallthru
      _
    // Predicated region
    $region50: #{rg_transformer.1} parent=1 // pred_check
      _
    $region51: #{rg_transformer.1} parent=1 // pred_check_branch
      %103 = sbr.rel (0) target = $region53
    $region52: #{rg_transformer.1} parent=1 // pred_region
      %104 = dma.done [#allocation6], 512
    $region53: #{rg_transformer.1} parent=1 // pred_fallthru
      _
    // Predicated region
    $region54: #{rg_transformer.1} parent=1 // pred_check
      _
    $region55: #{rg_transformer.1} parent=1 // pred_check_branch
      %106 = sbr.rel (0) target = $region57
    $region56: #{rg_transformer.1} parent=1 // pred_region
      %107 = dma.done [#allocation9], 128
    $region57: #{rg_transformer.1} parent=1 // pred_fallthru
      _
    // Predicated region
    $region58: #{rg_transformer.1} parent=1 // pred_check
      _
    $region59: #{rg_transformer.1} parent=1 // pred_check_branch
      %109 = sbr.rel (0) target = $region61
    $region60: #{rg_transformer.1} parent=1 // pred_region
      %110 = dma.done [#allocation9], 1024
    $region61: #{rg_transformer.1} parent=1 // pred_fallthru
      _
    // Predicated region
    $region62: #{rg_transformer.1} parent=1 // pred_check
      _
    $region63: #{rg_transformer.1} parent=1 // pred_check_branch
      %112 = sbr.rel (0) target = $region65
    $region64: #{rg_transformer.1} parent=1 // pred_region
      %113 = dma.done [#allocation12], 128
    $region65: #{rg_transformer.1} parent=1 // pred_fallthru
      _
    %v114 = vld [vmem:[#allocation2] sm:$0xff]
    %v115 = vld [vmem:[#allocation2 + $0x8] sm:$0xff]
    %v116 = vld [vmem:[#allocation8] sm:$0x1f]
    %v117 = vlaneseq
    %v118 = vshrl.u32 %v117, 7
    %v119 = vsub.s32 0, %v118
    %v120 = vrot.slane %v116, %v119
    %v121 = vlaneseq
    %v122 = vshrl.u32 %v121, 7
    %v123 = vsub.s32 1, %v122
    %v124 = vrot.slane %v116, %v123
    %v125 = vlaneseq
    %v126 = vshrl.u32 %v125, 7
    %v127 = vsub.s32 2, %v126
    %v128 = vrot.slane %v116, %v127
    %v129 = vlaneseq
    %v130 = vshrl.u32 %v129, 7
    %v131 = vsub.s32 3, %v130
    %v132 = vrot.slane %v116, %v131
    %v133 = vlaneseq
    %v134 = vshrl.u32 %v133, 7
    %v135 = vsub.s32 4, %v134
    %v136 = vrot.slane %v116, %v135
    %vm137 = vcmask 261120
    %v138 = vsel %vm137, %v114, 0.0
    %139 = vadd.xlane.f32.xlu0 %v138
    %v140 = vpop.xlane.xlu0 %139
    %v141 = vsel %vm137, %v115, 0.0
    %142 = vadd.xlane.f32.xlu0 %v141
    %v143 = vpop.xlane.xlu0 %142
    %v144 = vrcp.pop 32.0
    %v145 = vmul.f32 %v140, %v144
    %v146 = vmul.f32 %v143, %v144
    %v147 = vsub.f32 %v114, %v145
    %v148 = vsub.f32 %v115, %v146
    %v149 = vmul.f32 %v147, %v147
    %v150 = vmul.f32 %v148, %v148
    %v151 = vsel %vm137, %v149, 0.0
    %152 = vadd.xlane.f32.xlu0 %v151
    %v153 = vpop.xlane.xlu0 %152
    %v154 = vsel %vm137, %v150, 0.0
    %155 = vadd.xlane.f32.xlu0 %v154
    %v156 = vpop.xlane.xlu0 %155
    %v157 = vmul.f32 %v153, %v144
    %v158 = vmul.f32 %v156, %v144
    %v159 = vadd.f32 %v157, 1e-05
    %v160 = vadd.f32 %v158, 1e-05
    %v161 = vrsqrt.pop %v159
    %v162 = vrsqrt.pop %v160
    %v163 = vmul.f32 %v147, %v161
    %v164 = vmul.f32 %v148, %v162
    %v165 = vmul.f32 %v163, %v120
    %v166 = vmul.f32 %v164, %v120
    %v167 = vadd.f32 %v165, %v124
    %v168 = vadd.f32 %v166, %v124
    %v169 = vld [vmem:[%s1] sm:$0xff]
    %v170 = vld [vmem:[%s1 + $0x8] sm:$0xff]
    %v171 = vld [vmem:[%s1 + $0x10] sm:$0xff]
    %v172 = vld [vmem:[%s1 + $0x18] sm:$0xff]
    %v173 = vld [vmem:[%s2] sm:$0x1]
    %v175 = vlaneseq
    %v176 = vshrl.u32 %v175, 7
    %v177 = vsub.s32 0, %v176
    %v178 = vrot.slane %v173, %v177
    %v181 = vsel %vm137, %v167, 0
    %v184 = vsel %vm137, %v168, 0
    %186 = vmatprep.subr.mxu0 0.0
    %187 = vmatpush1.msra.mxu0 %v169
    %188 = vmatprep.subr.mxu0 0.0
    %189 = vmatpush1.msra.mxu0 %v170
    %190 = vmatprep.subr.mxu0 0.0
    %191 = vmatpush1.msra.mxu0 %v171
    %192 = vmatprep.subr.mxu0 0.0
    %193 = vmatpush1.msra.mxu0 %v172
    %194 = vmatprep.subr.mxu0 0.0
    %195 = vmatpush1.msra.mxu0 0.0
    %196 = vmatprep.subr.mxu0 0.0
    %197 = vmatpush1.msra.mxu0 0.0
    %198 = vmatprep.subr.mxu0 0.0
    %199 = vmatpush1.msra.mxu0 0.0
    %200 = vmatprep.subr.mxu0 0.0
    %201 = vmatpush1.msra.mxu0 0.0
    %202 = vmatprep.subr.mxu0 0.0
    %203 = vmatpush1.msra.mxu0 0.0
    %204 = vmatprep.subr.mxu0 0.0
    %205 = vmatpush1.msra.mxu0 0.0
    %206 = vmatprep.subr.mxu0 0.0
    %207 = vmatpush1.msra.mxu0 0.0
    %208 = vmatprep.subr.mxu0 0.0
    %209 = vmatpush1.msra.mxu0 0.0
    %210 = vmatprep.subr.mxu0 0.0
    %211 = vmatpush1.msra.mxu0 0.0
    %212 = vmatprep.subr.mxu0 0.0
    %213 = vmatpush1.msra.mxu0 0.0
    %214 = vmatprep.subr.mxu0 0.0
    %215 = vmatpush1.msra.mxu0 0.0
    %216 = vmatprep.subr.mxu0 0.0
    %217 = vmatpush1.msra.mxu0 0.0
    %218 = vmatprep.subr.mxu0 0.0
    %219 = vmatpush1.msra.mxu0 0.0
    %220 = vmatprep.subr.mxu0 0.0
    %221 = vmatpush1.msra.mxu0 0.0
    %222 = vmatprep.subr.mxu0 0.0
    %223 = vmatpush1.msra.mxu0 0.0
    %224 = vmatprep.subr.mxu0 0.0
    %225 = vmatpush1.msra.mxu0 0.0
    %226 = vmatprep.subr.mxu0 0.0
    %227 = vmatpush1.msra.mxu0 0.0
    %228 = vmatprep.subr.mxu0 0.0
    %229 = vmatpush1.msra.mxu0 0.0
    %230 = vmatprep.subr.mxu0 0.0
    %231 = vmatpush1.msra.mxu0 0.0
    %232 = vmatprep.subr.mxu0 0.0
    %233 = vmatpush1.msra.mxu0 0.0
    %234 = vmatprep.subr.mxu0 0.0
    %235 = vmatpush1.msra.mxu0 0.0
    %236 = vmatprep.subr.mxu0 0.0
    %237 = vmatpush1.msra.mxu0 0.0
    %238 = vmatprep.subr.mxu0 0.0
    %239 = vmatpush1.msra.mxu0 0.0
    %240 = vmatprep.subr.mxu0 0.0
    %241 = vmatpush1.msra.mxu0 0.0
    %242 = vmatprep.subr.mxu0 0.0
    %243 = vmatpush1.msra.mxu0 0.0
    %244 = vmatprep.subr.mxu0 0.0
    %245 = vmatpush1.msra.mxu0 0.0
    %246 = vmatprep.subr.mxu0 0.0
    %247 = vmatpush1.msra.mxu0 0.0
    %248 = vmatprep.subr.mxu0 0.0
    %249 = vmatpush1.msra.mxu0 0.0
    %250 = vmatprep.mubr.f32.mxu0 0.0
    %251 = vmatmul.mubr.f32.gmra.mrb[0].mxu0 %v181
    %v252 = vpop.f32.mrb[0].mxu0
    %v253 = vadd.f32 %v178, %v252
    %v254 = vpop.f32.mrb[0].mxu0
    %255 = vmatprep.mubr.f32.mxu0 0.0
    %256 = vmatmul.mubr.f32.gmra.mrb[0].mxu0 %v184
    %v257 = vpop.f32.mrb[0].mxu0
    %v258 = vadd.f32 %v178, %v257
    %v259 = vpop.f32.mrb[0].mxu0
    %260 = vdwg.mxu0
    %v263 = vcombine.high %v253, %v253
    %v265 = vunpack.c.l.s4 1966171168
    %v266 = vunpack.c.0.s8 %v265
    %v267 = vlaneseq
    %v268 = vshrl.u32 %v267, 7
    %v269 = vsub.s32 %v266, %v268
    %v270 = vrot.slane %v253, %v269
    %v272 = vunpack.c.l.s4 1966171168
    %v273 = vunpack.c.0.s8 %v272
    %v274 = vlaneseq
    %v275 = vshrl.u32 %v274, 7
    %v276 = vsub.s32 %v273, %v275
    %v277 = vrot.slane %v263, %v276
    %v278 = vcombine.high %v270, %v270
    %v279 = vcombine.high %v277, %v277
    %v281 = vunpack.c.l.s4 1966171168
    %v282 = vunpack.c.0.s8 %v281
    %v283 = vlaneseq
    %v284 = vshrl.u32 %v283, 7
    %v285 = vsub.s32 %v282, %v284
    %v286 = vrot.slane %v270, %v285
    %v288 = vunpack.c.l.s4 1966171168
    %v289 = vunpack.c.0.s8 %v288
    %v290 = vlaneseq
    %v291 = vshrl.u32 %v290, 7
    %v292 = vsub.s32 %v289, %v291
    %v293 = vrot.slane %v277, %v292
    %v295 = vunpack.c.l.s4 1966171168
    %v296 = vunpack.c.0.s8 %v295
    %v297 = vlaneseq
    %v298 = vshrl.u32 %v297, 7
    %v299 = vsub.s32 %v296, %v298
    %v300 = vrot.slane %v278, %v299
    %v302 = vunpack.c.l.s4 1966171168
    %v303 = vunpack.c.0.s8 %v302
    %v304 = vlaneseq
    %v305 = vshrl.u32 %v304, 7
    %v306 = vsub.s32 %v303, %v305
    %v307 = vrot.slane %v279, %v306
    %v308 = vcombine.high %v286, %v286
    %v309 = vcombine.high %v293, %v293
    %v310 = vcombine.high %v300, %v300
    %v311 = vcombine.high %v307, %v307
    %v312 = vcombine.high %v258, %v258
    %v314 = vunpack.c.l.s4 1966171168
    %v315 = vunpack.c.0.s8 %v314
    %v316 = vlaneseq
    %v317 = vshrl.u32 %v316, 7
    %v318 = vsub.s32 %v315, %v317
    %v319 = vrot.slane %v258, %v318
    %v321 = vunpack.c.l.s4 1966171168
    %v322 = vunpack.c.0.s8 %v321
    %v323 = vlaneseq
    %v324 = vshrl.u32 %v323, 7
    %v325 = vsub.s32 %v322, %v324
    %v326 = vrot.slane %v312, %v325
    %v327 = vcombine.high %v319, %v319
    %v328 = vcombine.high %v326, %v326
    %v330 = vunpack.c.l.s4 1966171168
    %v331 = vunpack.c.0.s8 %v330
    %v332 = vlaneseq
    %v333 = vshrl.u32 %v332, 7
    %v334 = vsub.s32 %v331, %v333
    %v335 = vrot.slane %v319, %v334
    %v337 = vunpack.c.l.s4 1966171168
    %v338 = vunpack.c.0.s8 %v337
    %v339 = vlaneseq
    %v340 = vshrl.u32 %v339, 7
    %v341 = vsub.s32 %v338, %v340
    %v342 = vrot.slane %v326, %v341
    %v344 = vunpack.c.l.s4 1966171168
    %v345 = vunpack.c.0.s8 %v344
    %v346 = vlaneseq
    %v347 = vshrl.u32 %v346, 7
    %v348 = vsub.s32 %v345, %v347
    %v349 = vrot.slane %v327, %v348
    %v351 = vunpack.c.l.s4 1966171168
    %v352 = vunpack.c.0.s8 %v351
    %v353 = vlaneseq
    %v354 = vshrl.u32 %v353, 7
    %v355 = vsub.s32 %v352, %v354
    %v356 = vrot.slane %v328, %v355
    %v357 = vcombine.high %v335, %v335
    %v358 = vcombine.high %v342, %v342
    %v359 = vcombine.high %v349, %v349
    %v360 = vcombine.high %v356, %v356
    %v361 = vlaneseq
    %v362 = vshrl.u32 %v361, 7
    %v363 = vsub.s32 0, %v362
    %v364 = vrot.slane %v286, %v363
    %v365 = vlaneseq
    %v366 = vshrl.u32 %v365, 7
    %v367 = vsub.s32 0, %v366
    %v368 = vrot.slane %v300, %v367
    %v369 = vlaneseq
    %v370 = vshrl.u32 %v369, 7
    %v371 = vsub.s32 0, %v370
    %v372 = vrot.slane %v308, %v371
    %v373 = vlaneseq
    %v374 = vshrl.u32 %v373, 7
    %v375 = vsub.s32 0, %v374
    %v376 = vrot.slane %v310, %v375
    %v377 = vlaneseq
    %v378 = vshrl.u32 %v377, 7
    %v379 = vsub.s32 0, %v378
    %v380 = vrot.slane %v293, %v379
    %v381 = vlaneseq
    %v382 = vshrl.u32 %v381, 7
    %v383 = vsub.s32 0, %v382
    %v384 = vrot.slane %v307, %v383
    %v385 = vlaneseq
    %v386 = vshrl.u32 %v385, 7
    %v387 = vsub.s32 0, %v386
    %v388 = vrot.slane %v309, %v387
    %v389 = vlaneseq
    %v390 = vshrl.u32 %v389, 7
    %v391 = vsub.s32 0, %v390
    %v392 = vrot.slane %v311, %v391
    %v393 = vlaneseq
    %v394 = vshrl.u32 %v393, 7
    %v395 = vsub.s32 0, %v394
    %v396 = vrot.slane %v335, %v395
    %v397 = vlaneseq
    %v398 = vshrl.u32 %v397, 7
    %v399 = vsub.s32 0, %v398
    %v400 = vrot.slane %v349, %v399
    %v401 = vlaneseq
    %v402 = vshrl.u32 %v401, 7
    %v403 = vsub.s32 0, %v402
    %v404 = vrot.slane %v357, %v403
    %v405 = vlaneseq
    %v406 = vshrl.u32 %v405, 7
    %v407 = vsub.s32 0, %v406
    %v408 = vrot.slane %v359, %v407
    %v409 = vlaneseq
    %v410 = vshrl.u32 %v409, 7
    %v411 = vsub.s32 0, %v410
    %v412 = vrot.slane %v342, %v411
    %v413 = vlaneseq
    %v414 = vshrl.u32 %v413, 7
    %v415 = vsub.s32 0, %v414
    %v416 = vrot.slane %v356, %v415
    %v417 = vlaneseq
    %v418 = vshrl.u32 %v417, 7
    %v419 = vsub.s32 0, %v418
    %v420 = vrot.slane %v358, %v419
    %v421 = vlaneseq
    %v422 = vshrl.u32 %v421, 7
    %v423 = vsub.s32 0, %v422
    %v424 = vrot.slane %v360, %v423
    %441 = vrot.lane.b32.xlu0 %v253, 96
    %v442 = vpop.permute.xlu0 %441
    %443 = vrot.lane.b32.xlu0 %v258, 96
    %v444 = vpop.permute.xlu0 %443
    %v447 = vmul.f32 %v364, %v442
    %v448 = vmul.f32 %v368, %v442
    %v449 = vmul.f32 %v372, %v442
    %v450 = vmul.f32 %v376, %v442
    %v451 = vmul.f32 %v380, %v442
    %v452 = vmul.f32 %v384, %v442
    %v453 = vmul.f32 %v388, %v442
    %v454 = vmul.f32 %v392, %v442
    %v455 = vmul.f32 %v396, %v444
    %v456 = vmul.f32 %v400, %v444
    %v457 = vmul.f32 %v404, %v444
    %v458 = vmul.f32 %v408, %v444
    %v459 = vmul.f32 %v412, %v444
    %v460 = vmul.f32 %v416, %v444
    %v461 = vmul.f32 %v420, %v444
    %v462 = vmul.f32 %v424, %v444
    %v463 = vld [vmem:[%s8] sm:$0xff]
    %v464 = vld [vmem:[%s8 + $0x8] sm:$0xff]
    %v465 = vld [vmem:[%s8 + $0x10] sm:$0xff]
    %v466 = vld [vmem:[%s8 + $0x18] sm:$0xff]
    %v468 = vsel %vm137, %v447, 0
    %v471 = vsel %vm137, %v448, 0
    %v474 = vsel %vm137, %v449, 0
    %v477 = vsel %vm137, %v450, 0
    %v480 = vsel %vm137, %v451, 0
    %v483 = vsel %vm137, %v452, 0
    %v486 = vsel %vm137, %v453, 0
    %v489 = vsel %vm137, %v454, 0
    %v492 = vsel %vm137, %v455, 0
    %v495 = vsel %vm137, %v456, 0
    %v498 = vsel %vm137, %v457, 0
    %v501 = vsel %vm137, %v458, 0
    %v504 = vsel %vm137, %v459, 0
    %v507 = vsel %vm137, %v460, 0
    %v510 = vsel %vm137, %v461, 0
    %v513 = vsel %vm137, %v462, 0
    %515 = vmatprep.subr.mxu0 0.0
    %516 = vmatpush1.msra.mxu0 %v463
    %517 = vmatprep.subr.mxu0 0.0
    %518 = vmatpush1.msra.mxu0 %v464
    %519 = vmatprep.subr.mxu0 0.0
    %520 = vmatpush1.msra.mxu0 %v465
    %521 = vmatprep.subr.mxu0 0.0
    %522 = vmatpush1.msra.mxu0 %v466
    %523 = vmatprep.subr.mxu0 0.0
    %524 = vmatpush1.msra.mxu0 0.0
    %525 = vmatprep.subr.mxu0 0.0
    %526 = vmatpush1.msra.mxu0 0.0
    %527 = vmatprep.subr.mxu0 0.0
    %528 = vmatpush1.msra.mxu0 0.0
    %529 = vmatprep.subr.mxu0 0.0
    %530 = vmatpush1.msra.mxu0 0.0
    %531 = vmatprep.subr.mxu0 0.0
    %532 = vmatpush1.msra.mxu0 0.0
    %533 = vmatprep.subr.mxu0 0.0
    %534 = vmatpush1.msra.mxu0 0.0
    %535 = vmatprep.subr.mxu0 0.0
    %536 = vmatpush1.msra.mxu0 0.0
    %537 = vmatprep.subr.mxu0 0.0
    %538 = vmatpush1.msra.mxu0 0.0
    %539 = vmatprep.subr.mxu0 0.0
    %540 = vmatpush1.msra.mxu0 0.0
    %541 = vmatprep.subr.mxu0 0.0
    %542 = vmatpush1.msra.mxu0 0.0
    %543 = vmatprep.subr.mxu0 0.0
    %544 = vmatpush1.msra.mxu0 0.0
    %545 = vmatprep.subr.mxu0 0.0
    %546 = vmatpush1.msra.mxu0 0.0
    %547 = vmatprep.subr.mxu0 0.0
    %548 = vmatpush1.msra.mxu0 0.0
    %549 = vmatprep.subr.mxu0 0.0
    %550 = vmatpush1.msra.mxu0 0.0
    %551 = vmatprep.subr.mxu0 0.0
    %552 = vmatpush1.msra.mxu0 0.0
    %553 = vmatprep.subr.mxu0 0.0
    %554 = vmatpush1.msra.mxu0 0.0
    %555 = vmatprep.subr.mxu0 0.0
    %556 = vmatpush1.msra.mxu0 0.0
    %557 = vmatprep.subr.mxu0 0.0
    %558 = vmatpush1.msra.mxu0 0.0
    %559 = vmatprep.subr.mxu0 0.0
    %560 = vmatpush1.msra.mxu0 0.0
    %561 = vmatprep.subr.mxu0 0.0
    %562 = vmatpush1.msra.mxu0 0.0
    %563 = vmatprep.subr.mxu0 0.0
    %564 = vmatpush1.msra.mxu0 0.0
    %565 = vmatprep.subr.mxu0 0.0
    %566 = vmatpush1.msra.mxu0 0.0
    %567 = vmatprep.subr.mxu0 0.0
    %568 = vmatpush1.msra.mxu0 0.0
    %569 = vmatprep.subr.mxu0 0.0
    %570 = vmatpush1.msra.mxu0 0.0
    %571 = vmatprep.subr.mxu0 0.0
    %572 = vmatpush1.msra.mxu0 0.0
    %573 = vmatprep.subr.mxu0 0.0
    %574 = vmatpush1.msra.mxu0 0.0
    %575 = vmatprep.subr.mxu0 0.0
    %576 = vmatpush1.msra.mxu0 0.0
    %577 = vmatprep.subr.mxu0 0.0
    %578 = vmatpush1.msra.mxu0 0.0
    %579 = vmatprep.mubr.f32.mxu0 0.0
    %580 = vmatmul.mubr.f32.gmra.mrb[0].mxu0 %v468
    %v581 = vpop.f32.mrb[0].mxu0
    %v582 = vadd.f32 0.0, %v581
    %v583 = vpop.f32.mrb[0].mxu0
    %584 = vmatprep.mubr.f32.mxu0 0.0
    %585 = vmatmul.mubr.f32.gmra.mrb[0].mxu0 %v471
    %v586 = vpop.f32.mrb[0].mxu0
    %v587 = vadd.f32 0.0, %v586
    %v588 = vpop.f32.mrb[0].mxu0
    %589 = vmatprep.mubr.f32.mxu0 0.0
    %590 = vmatmul.mubr.f32.gmra.mrb[0].mxu0 %v474
    %v591 = vpop.f32.mrb[0].mxu0
    %v592 = vadd.f32 0.0, %v591
    %v593 = vpop.f32.mrb[0].mxu0
    %594 = vmatprep.mubr.f32.mxu0 0.0
    %595 = vmatmul.mubr.f32.gmra.mrb[0].mxu0 %v477
    %v596 = vpop.f32.mrb[0].mxu0
    %v597 = vadd.f32 0.0, %v596
    %v598 = vpop.f32.mrb[0].mxu0
    %599 = vmatprep.mubr.f32.mxu0 0.0
    %600 = vmatmul.mubr.f32.gmra.mrb[0].mxu0 %v480
    %v601 = vpop.f32.mrb[0].mxu0
    %v602 = vadd.f32 0.0, %v601
    %v603 = vpop.f32.mrb[0].mxu0
    %604 = vmatprep.mubr.f32.mxu0 0.0
    %605 = vmatmul.mubr.f32.gmra.mrb[0].mxu0 %v483
    %v606 = vpop.f32.mrb[0].mxu0
    %v607 = vadd.f32 0.0, %v606
    %v608 = vpop.f32.mrb[0].mxu0
    %609 = vmatprep.mubr.f32.mxu0 0.0
    %610 = vmatmul.mubr.f32.gmra.mrb[0].mxu0 %v486
    %v611 = vpop.f32.mrb[0].mxu0
    %v612 = vadd.f32 0.0, %v611
    %v613 = vpop.f32.mrb[0].mxu0
    %614 = vmatprep.mubr.f32.mxu0 0.0
    %615 = vmatmul.mubr.f32.gmra.mrb[0].mxu0 %v489
    %v616 = vpop.f32.mrb[0].mxu0
    %v617 = vadd.f32 0.0, %v616
    %v618 = vpop.f32.mrb[0].mxu0
    %619 = vmatprep.mubr.f32.mxu0 0.0
    %620 = vmatmul.mubr.f32.gmra.mrb[0].mxu0 %v492
    %v621 = vpop.f32.mrb[0].mxu0
    %v622 = vadd.f32 0.0, %v621
    %v623 = vpop.f32.mrb[0].mxu0
    %624 = vmatprep.mubr.f32.mxu0 0.0
    %625 = vmatmul.mubr.f32.gmra.mrb[0].mxu0 %v495
    %v626 = vpop.f32.mrb[0].mxu0
    %v627 = vadd.f32 0.0, %v626
    %v628 = vpop.f32.mrb[0].mxu0
    %629 = vmatprep.mubr.f32.mxu0 0.0
    %630 = vmatmul.mubr.f32.gmra.mrb[0].mxu0 %v498
    %v631 = vpop.f32.mrb[0].mxu0
    %v632 = vadd.f32 0.0, %v631
    %v633 = vpop.f32.mrb[0].mxu0
    %634 = vmatprep.mubr.f32.mxu0 0.0
    %635 = vmatmul.mubr.f32.gmra.mrb[0].mxu0 %v501
    %v636 = vpop.f32.mrb[0].mxu0
    %v637 = vadd.f32 0.0, %v636
    %v638 = vpop.f32.mrb[0].mxu0
    %639 = vmatprep.mubr.f32.mxu0 0.0
    %640 = vmatmul.mubr.f32.gmra.mrb[0].mxu0 %v504
    %v641 = vpop.f32.mrb[0].mxu0
    %v642 = vadd.f32 0.0, %v641
    %v643 = vpop.f32.mrb[0].mxu0
    %644 = vmatprep.mubr.f32.mxu0 0.0
    %645 = vmatmul.mubr.f32.gmra.mrb[0].mxu0 %v507
    %v646 = vpop.f32.mrb[0].mxu0
    %v647 = vadd.f32 0.0, %v646
    %v648 = vpop.f32.mrb[0].mxu0
    %649 = vmatprep.mubr.f32.mxu0 0.0
    %650 = vmatmul.mubr.f32.gmra.mrb[0].mxu0 %v510
    %v651 = vpop.f32.mrb[0].mxu0
    %v652 = vadd.f32 0.0, %v651
    %v653 = vpop.f32.mrb[0].mxu0
    %654 = vmatprep.mubr.f32.mxu0 0.0
    %655 = vmatmul.mubr.f32.gmra.mrb[0].mxu0 %v513
    %v656 = vpop.f32.mrb[0].mxu0
    %v657 = vadd.f32 0.0, %v656
    %v658 = vpop.f32.mrb[0].mxu0
    %659 = vdwg.mxu0
    %v660 = vld [vmem:[#allocation10] sm:$0xff]
    %v661 = vld [vmem:[#allocation10 + $0x8] sm:$0xff]
    %v662 = vld [vmem:[#allocation10 + $0x10] sm:$0xff]
    %v663 = vld [vmem:[#allocation10 + $0x18] sm:$0xff]
    %v664 = vld [vmem:[#allocation10 + $0x20] sm:$0xff]
    %v665 = vld [vmem:[#allocation10 + $0x28] sm:$0xff]
    %v666 = vld [vmem:[#allocation10 + $0x30] sm:$0xff]
    %v667 = vld [vmem:[#allocation10 + $0x38] sm:$0xff]
    %v668 = vadd.f32 %v582, %v660
    %v669 = vadd.f32 %v587, %v661
    %v670 = vadd.f32 %v592, %v662
    %v671 = vadd.f32 %v597, %v663
    %v672 = vadd.f32 %v602, %v664
    %v673 = vadd.f32 %v607, %v665
    %v674 = vadd.f32 %v612, %v666
    %v675 = vadd.f32 %v617, %v667
    %v676 = vadd.f32 %v622, %v660
    %v677 = vadd.f32 %v627, %v661
    %v678 = vadd.f32 %v632, %v662
    %v679 = vadd.f32 %v637, %v663
    %v680 = vadd.f32 %v642, %v664
    %v681 = vadd.f32 %v647, %v665
    %v682 = vadd.f32 %v652, %v666
    %v683 = vadd.f32 %v657, %v667
    %vm684 = vcmask 64512
    %v685 = vsel %vm684, %v668, -inf
    %v686 = vrot.slane %v685, 4
    %v687 = vmax.f32 %v685, %v686
    %v688 = vrot.slane %v687, 2
    %v689 = vmax.f32 %v687, %v688
    %v690 = vrot.slane %v689, 1
    %v691 = vmax.f32 %v689, %v690
    %v692 = vsel %vm684, %v669, -inf
    %v693 = vrot.slane %v692, 4
    %v694 = vmax.f32 %v692, %v693
    %v695 = vrot.slane %v694, 2
    %v696 = vmax.f32 %v694, %v695
    %v697 = vrot.slane %v696, 1
    %v698 = vmax.f32 %v696, %v697
    %v699 = vsel %vm684, %v670, -inf
    %v700 = vrot.slane %v699, 4
    %v701 = vmax.f32 %v699, %v700
    %v702 = vrot.slane %v701, 2
    %v703 = vmax.f32 %v701, %v702
    %v704 = vrot.slane %v703, 1
    %v705 = vmax.f32 %v703, %v704
    %v706 = vsel %vm684, %v671, -inf
    %v707 = vrot.slane %v706, 4
    %v708 = vmax.f32 %v706, %v707
    %v709 = vrot.slane %v708, 2
    %v710 = vmax.f32 %v708, %v709
    %v711 = vrot.slane %v710, 1
    %v712 = vmax.f32 %v710, %v711
    %v713 = vsel %vm684, %v672, -inf
    %v714 = vrot.slane %v713, 4
    %v715 = vmax.f32 %v713, %v714
    %v716 = vrot.slane %v715, 2
    %v717 = vmax.f32 %v715, %v716
    %v718 = vrot.slane %v717, 1
    %v719 = vmax.f32 %v717, %v718
    %v720 = vsel %vm684, %v673, -inf
    %v721 = vrot.slane %v720, 4
    %v722 = vmax.f32 %v720, %v721
    %v723 = vrot.slane %v722, 2
    %v724 = vmax.f32 %v722, %v723
    %v725 = vrot.slane %v724, 1
    %v726 = vmax.f32 %v724, %v725
    %v727 = vsel %vm684, %v674, -inf
    %v728 = vrot.slane %v727, 4
    %v729 = vmax.f32 %v727, %v728
    %v730 = vrot.slane %v729, 2
    %v731 = vmax.f32 %v729, %v730
    %v732 = vrot.slane %v731, 1
    %v733 = vmax.f32 %v731, %v732
    %v734 = vsel %vm684, %v675, -inf
    %v735 = vrot.slane %v734, 4
    %v736 = vmax.f32 %v734, %v735
    %v737 = vrot.slane %v736, 2
    %v738 = vmax.f32 %v736, %v737
    %v739 = vrot.slane %v738, 1
    %v740 = vmax.f32 %v738, %v739
    %v741 = vsel %vm684, %v676, -inf
    %v742 = vrot.slane %v741, 4
    %v743 = vmax.f32 %v741, %v742
    %v744 = vrot.slane %v743, 2
    %v745 = vmax.f32 %v743, %v744
    %v746 = vrot.slane %v745, 1
    %v747 = vmax.f32 %v745, %v746
    %v748 = vsel %vm684, %v677, -inf
    %v749 = vrot.slane %v748, 4
    %v750 = vmax.f32 %v748, %v749
    %v751 = vrot.slane %v750, 2
    %v752 = vmax.f32 %v750, %v751
    %v753 = vrot.slane %v752, 1
    %v754 = vmax.f32 %v752, %v753
    %v755 = vsel %vm684, %v678, -inf
    %v756 = vrot.slane %v755, 4
    %v757 = vmax.f32 %v755, %v756
    %v758 = vrot.slane %v757, 2
    %v759 = vmax.f32 %v757, %v758
    %v760 = vrot.slane %v759, 1
    %v761 = vmax.f32 %v759, %v760
    %v762 = vsel %vm684, %v679, -inf
    %v763 = vrot.slane %v762, 4
    %v764 = vmax.f32 %v762, %v763
    %v765 = vrot.slane %v764, 2
    %v766 = vmax.f32 %v764, %v765
    %v767 = vrot.slane %v766, 1
    %v768 = vmax.f32 %v766, %v767
    %v769 = vsel %vm684, %v680, -inf
    %v770 = vrot.slane %v769, 4
    %v771 = vmax.f32 %v769, %v770
    %v772 = vrot.slane %v771, 2
    %v773 = vmax.f32 %v771, %v772
    %v774 = vrot.slane %v773, 1
    %v775 = vmax.f32 %v773, %v774
    %v776 = vsel %vm684, %v681, -inf
    %v777 = vrot.slane %v776, 4
    %v778 = vmax.f32 %v776, %v777
    %v779 = vrot.slane %v778, 2
    %v780 = vmax.f32 %v778, %v779
    %v781 = vrot.slane %v780, 1
    %v782 = vmax.f32 %v780, %v781
    %v783 = vsel %vm684, %v682, -inf
    %v784 = vrot.slane %v783, 4
    %v785 = vmax.f32 %v783, %v784
    %v786 = vrot.slane %v785, 2
    %v787 = vmax.f32 %v785, %v786
    %v788 = vrot.slane %v787, 1
    %v789 = vmax.f32 %v787, %v788
    %v790 = vsel %vm684, %v683, -inf
    %v791 = vrot.slane %v790, 4
    %v792 = vmax.f32 %v790, %v791
    %v793 = vrot.slane %v792, 2
    %v794 = vmax.f32 %v792, %v793
    %v795 = vrot.slane %v794, 1
    %v796 = vmax.f32 %v794, %v795
    %v797 = vsub.f32 %v668, %v691
    %v798 = vsub.f32 %v669, %v698
    %v799 = vsub.f32 %v670, %v705
    %v800 = vsub.f32 %v671, %v712
    %v801 = vsub.f32 %v672, %v719
    %v802 = vsub.f32 %v673, %v726
    %v803 = vsub.f32 %v674, %v733
    %v804 = vsub.f32 %v675, %v740
    %v805 = vsub.f32 %v676, %v747
    %v806 = vsub.f32 %v677, %v754
    %v807 = vsub.f32 %v678, %v761
    %v808 = vsub.f32 %v679, %v768
    %v809 = vsub.f32 %v680, %v775
    %v810 = vsub.f32 %v681, %v782
    %v811 = vsub.f32 %v682, %v789
    %v812 = vsub.f32 %v683, %v796
    %v813 = vmul.f32 %v797, 1.442695
    %v814 = vpow.pop %v813
    %v815 = vmul.f32 %v798, 1.442695
    %v816 = vpow.pop %v815
    %v817 = vmul.f32 %v799, 1.442695
    %v818 = vpow.pop %v817
    %v819 = vmul.f32 %v800, 1.442695
    %v820 = vpow.pop %v819
    %v821 = vmul.f32 %v801, 1.442695
    %v822 = vpow.pop %v821
    %v823 = vmul.f32 %v802, 1.442695
    %v824 = vpow.pop %v823
    %v825 = vmul.f32 %v803, 1.442695
    %v826 = vpow.pop %v825
    %v827 = vmul.f32 %v804, 1.442695
    %v828 = vpow.pop %v827
    %v829 = vmul.f32 %v805, 1.442695
    %v830 = vpow.pop %v829
    %v831 = vmul.f32 %v806, 1.442695
    %v832 = vpow.pop %v831
    %v833 = vmul.f32 %v807, 1.442695
    %v834 = vpow.pop %v833
    %v835 = vmul.f32 %v808, 1.442695
    %v836 = vpow.pop %v835
    %v837 = vmul.f32 %v809, 1.442695
    %v838 = vpow.pop %v837
    %v839 = vmul.f32 %v810, 1.442695
    %v840 = vpow.pop %v839
    %v841 = vmul.f32 %v811, 1.442695
    %v842 = vpow.pop %v841
    %v843 = vmul.f32 %v812, 1.442695
    %v844 = vpow.pop %v843
    %v845 = vsel %vm684, %v814, 0.0
    %v846 = vrot.slane %v845, 4
    %v847 = vadd.f32 %v845, %v846
    %v848 = vrot.slane %v847, 2
    %v849 = vadd.f32 %v847, %v848
    %v850 = vrot.slane %v849, 1
    %v851 = vadd.f32 %v849, %v850
    %v852 = vsel %vm684, %v816, 0.0
    %v853 = vrot.slane %v852, 4
    %v854 = vadd.f32 %v852, %v853
    %v855 = vrot.slane %v854, 2
    %v856 = vadd.f32 %v854, %v855
    %v857 = vrot.slane %v856, 1
    %v858 = vadd.f32 %v856, %v857
    %v859 = vsel %vm684, %v818, 0.0
    %v860 = vrot.slane %v859, 4
    %v861 = vadd.f32 %v859, %v860
    %v862 = vrot.slane %v861, 2
    %v863 = vadd.f32 %v861, %v862
    %v864 = vrot.slane %v863, 1
    %v865 = vadd.f32 %v863, %v864
    %v866 = vsel %vm684, %v820, 0.0
    %v867 = vrot.slane %v866, 4
    %v868 = vadd.f32 %v866, %v867
    %v869 = vrot.slane %v868, 2
    %v870 = vadd.f32 %v868, %v869
    %v871 = vrot.slane %v870, 1
    %v872 = vadd.f32 %v870, %v871
    %v873 = vsel %vm684, %v822, 0.0
    %v874 = vrot.slane %v873, 4
    %v875 = vadd.f32 %v873, %v874
    %v876 = vrot.slane %v875, 2
    %v877 = vadd.f32 %v875, %v876
    %v878 = vrot.slane %v877, 1
    %v879 = vadd.f32 %v877, %v878
    %v880 = vsel %vm684, %v824, 0.0
    %v881 = vrot.slane %v880, 4
    %v882 = vadd.f32 %v880, %v881
    %v883 = vrot.slane %v882, 2
    %v884 = vadd.f32 %v882, %v883
    %v885 = vrot.slane %v884, 1
    %v886 = vadd.f32 %v884, %v885
    %v887 = vsel %vm684, %v826, 0.0
    %v888 = vrot.slane %v887, 4
    %v889 = vadd.f32 %v887, %v888
    %v890 = vrot.slane %v889, 2
    %v891 = vadd.f32 %v889, %v890
    %v892 = vrot.slane %v891, 1
    %v893 = vadd.f32 %v891, %v892
    %v894 = vsel %vm684, %v828, 0.0
    %v895 = vrot.slane %v894, 4
    %v896 = vadd.f32 %v894, %v895
    %v897 = vrot.slane %v896, 2
    %v898 = vadd.f32 %v896, %v897
    %v899 = vrot.slane %v898, 1
    %v900 = vadd.f32 %v898, %v899
    %v901 = vsel %vm684, %v830, 0.0
    %v902 = vrot.slane %v901, 4
    %v903 = vadd.f32 %v901, %v902
    %v904 = vrot.slane %v903, 2
    %v905 = vadd.f32 %v903, %v904
    %v906 = vrot.slane %v905, 1
    %v907 = vadd.f32 %v905, %v906
    %v908 = vsel %vm684, %v832, 0.0
    %v909 = vrot.slane %v908, 4
    %v910 = vadd.f32 %v908, %v909
    %v911 = vrot.slane %v910, 2
    %v912 = vadd.f32 %v910, %v911
    %v913 = vrot.slane %v912, 1
    %v914 = vadd.f32 %v912, %v913
    %v915 = vsel %vm684, %v834, 0.0
    %v916 = vrot.slane %v915, 4
    %v917 = vadd.f32 %v915, %v916
    %v918 = vrot.slane %v917, 2
    %v919 = vadd.f32 %v917, %v918
    %v920 = vrot.slane %v919, 1
    %v921 = vadd.f32 %v919, %v920
    %v922 = vsel %vm684, %v836, 0.0
    %v923 = vrot.slane %v922, 4
    %v924 = vadd.f32 %v922, %v923
    %v925 = vrot.slane %v924, 2
    %v926 = vadd.f32 %v924, %v925
    %v927 = vrot.slane %v926, 1
    %v928 = vadd.f32 %v926, %v927
    %v929 = vsel %vm684, %v838, 0.0
    %v930 = vrot.slane %v929, 4
    %v931 = vadd.f32 %v929, %v930
    %v932 = vrot.slane %v931, 2
    %v933 = vadd.f32 %v931, %v932
    %v934 = vrot.slane %v933, 1
    %v935 = vadd.f32 %v933, %v934
    %v936 = vsel %vm684, %v840, 0.0
    %v937 = vrot.slane %v936, 4
    %v938 = vadd.f32 %v936, %v937
    %v939 = vrot.slane %v938, 2
    %v940 = vadd.f32 %v938, %v939
    %v941 = vrot.slane %v940, 1
    %v942 = vadd.f32 %v940, %v941
    %v943 = vsel %vm684, %v842, 0.0
    %v944 = vrot.slane %v943, 4
    %v945 = vadd.f32 %v943, %v944
    %v946 = vrot.slane %v945, 2
    %v947 = vadd.f32 %v945, %v946
    %v948 = vrot.slane %v947, 1
    %v949 = vadd.f32 %v947, %v948
    %v950 = vsel %vm684, %v844, 0.0
    %v951 = vrot.slane %v950, 4
    %v952 = vadd.f32 %v950, %v951
    %v953 = vrot.slane %v952, 2
    %v954 = vadd.f32 %v952, %v953
    %v955 = vrot.slane %v954, 1
    %v956 = vadd.f32 %v954, %v955
    %v957 = vrcp.pop %v851
    %v958 = vmul.f32 %v814, %v957
    %v959 = vrcp.pop %v858
    %v960 = vmul.f32 %v816, %v959
    %v961 = vrcp.pop %v865
    %v962 = vmul.f32 %v818, %v961
    %v963 = vrcp.pop %v872
    %v964 = vmul.f32 %v820, %v963
    %v965 = vrcp.pop %v879
    %v966 = vmul.f32 %v822, %v965
    %v967 = vrcp.pop %v886
    %v968 = vmul.f32 %v824, %v967
    %v969 = vrcp.pop %v893
    %v970 = vmul.f32 %v826, %v969
    %v971 = vrcp.pop %v900
    %v972 = vmul.f32 %v828, %v971
    %v973 = vrcp.pop %v907
    %v974 = vmul.f32 %v830, %v973
    %v975 = vrcp.pop %v914
    %v976 = vmul.f32 %v832, %v975
    %v977 = vrcp.pop %v921
    %v978 = vmul.f32 %v834, %v977
    %v979 = vrcp.pop %v928
    %v980 = vmul.f32 %v836, %v979
    %v981 = vrcp.pop %v935
    %v982 = vmul.f32 %v838, %v981
    %v983 = vrcp.pop %v942
    %v984 = vmul.f32 %v840, %v983
    %v985 = vrcp.pop %v949
    %v986 = vmul.f32 %v842, %v985
    %v987 = vrcp.pop %v956
    %v988 = vmul.f32 %v844, %v987
    %v989 = vld [vmem:[#allocation11] sm:$0xff]
    %v991 = vsel %vm684, %v958, 0
    %v994 = vsel %vm684, %v960, 0
    %v997 = vsel %vm684, %v962, 0
    %v1000 = vsel %vm684, %v964, 0
    %v1003 = vsel %vm684, %v966, 0
    %v1006 = vsel %vm684, %v968, 0
    %v1009 = vsel %vm684, %v970, 0
    %v1012 = vsel %vm684, %v972, 0
    %v1015 = vsel %vm684, %v974, 0
    %v1018 = vsel %vm684, %v976, 0
    %v1021 = vsel %vm684, %v978, 0
    %v1024 = vsel %vm684, %v980, 0
    %v1027 = vsel %vm684, %v982, 0
    %v1030 = vsel %vm684, %v984, 0
    %v1033 = vsel %vm684, %v986, 0
    %v1036 = vsel %vm684, %v988, 0
    %1038 = vmatprep.subr.mxu0 0.0
    %1039 = vmatpush1.msra.mxu0 %v989
    %1040 = vmatprep.subr.mxu0 0.0
    %1041 = vmatpush1.msra.mxu0 0.0
    %1042 = vmatprep.subr.mxu0 0.0
    %1043 = vmatpush1.msra.mxu0 0.0
    %1044 = vmatprep.subr.mxu0 0.0
    %1045 = vmatpush1.msra.mxu0 0.0
    %1046 = vmatprep.subr.mxu0 0.0
    %1047 = vmatpush1.msra.mxu0 0.0
    %1048 = vmatprep.subr.mxu0 0.0
    %1049 = vmatpush1.msra.mxu0 0.0
    %1050 = vmatprep.subr.mxu0 0.0
    %1051 = vmatpush1.msra.mxu0 0.0
    %1052 = vmatprep.subr.mxu0 0.0
    %1053 = vmatpush1.msra.mxu0 0.0
    %1054 = vmatprep.subr.mxu0 0.0
    %1055 = vmatpush1.msra.mxu0 0.0
    %1056 = vmatprep.subr.mxu0 0.0
    %1057 = vmatpush1.msra.mxu0 0.0
    %1058 = vmatprep.subr.mxu0 0.0
    %1059 = vmatpush1.msra.mxu0 0.0
    %1060 = vmatprep.subr.mxu0 0.0
    %1061 = vmatpush1.msra.mxu0 0.0
    %1062 = vmatprep.subr.mxu0 0.0
    %1063 = vmatpush1.msra.mxu0 0.0
    %1064 = vmatprep.subr.mxu0 0.0
    %1065 = vmatpush1.msra.mxu0 0.0
    %1066 = vmatprep.subr.mxu0 0.0
    %1067 = vmatpush1.msra.mxu0 0.0
    %1068 = vmatprep.subr.mxu0 0.0
    %1069 = vmatpush1.msra.mxu0 0.0
    %1070 = vmatprep.subr.mxu0 0.0
    %1071 = vmatpush1.msra.mxu0 0.0
    %1072 = vmatprep.subr.mxu0 0.0
    %1073 = vmatpush1.msra.mxu0 0.0
    %1074 = vmatprep.subr.mxu0 0.0
    %1075 = vmatpush1.msra.mxu0 0.0
    %1076 = vmatprep.subr.mxu0 0.0
    %1077 = vmatpush1.msra.mxu0 0.0
    %1078 = vmatprep.subr.mxu0 0.0
    %1079 = vmatpush1.msra.mxu0 0.0
    %1080 = vmatprep.subr.mxu0 0.0
    %1081 = vmatpush1.msra.mxu0 0.0
    %1082 = vmatprep.subr.mxu0 0.0
    %1083 = vmatpush1.msra.mxu0 0.0
    %1084 = vmatprep.subr.mxu0 0.0
    %1085 = vmatpush1.msra.mxu0 0.0
    %1086 = vmatprep.subr.mxu0 0.0
    %1087 = vmatpush1.msra.mxu0 0.0
    %1088 = vmatprep.subr.mxu0 0.0
    %1089 = vmatpush1.msra.mxu0 0.0
    %1090 = vmatprep.subr.mxu0 0.0
    %1091 = vmatpush1.msra.mxu0 0.0
    %1092 = vmatprep.subr.mxu0 0.0
    %1093 = vmatpush1.msra.mxu0 0.0
    %1094 = vmatprep.subr.mxu0 0.0
    %1095 = vmatpush1.msra.mxu0 0.0
    %1096 = vmatprep.subr.mxu0 0.0
    %1097 = vmatpush1.msra.mxu0 0.0
    %1098 = vmatprep.subr.mxu0 0.0
    %1099 = vmatpush1.msra.mxu0 0.0
    %1100 = vmatprep.subr.mxu0 0.0
    %1101 = vmatpush1.msra.mxu0 0.0
    %1102 = vmatprep.mubr.f32.mxu0 0.0
    %1103 = vmatmul.mubr.f32.gmra.mrb[0].mxu0 %v991
    %v1104 = vpop.f32.mrb[0].mxu0
    %v1105 = vadd.f32 0.0, %v1104
    %v1106 = vpop.f32.mrb[0].mxu0
    %1107 = vmatprep.mubr.f32.mxu0 0.0
    %1108 = vmatmul.mubr.f32.gmra.mrb[0].mxu0 %v994
    %v1109 = vpop.f32.mrb[0].mxu0
    %v1110 = vadd.f32 0.0, %v1109
    %v1111 = vpop.f32.mrb[0].mxu0
    %1112 = vmatprep.mubr.f32.mxu0 0.0
    %1113 = vmatmul.mubr.f32.gmra.mrb[0].mxu0 %v997
    %v1114 = vpop.f32.mrb[0].mxu0
    %v1115 = vadd.f32 0.0, %v1114
    %v1116 = vpop.f32.mrb[0].mxu0
    %1117 = vmatprep.mubr.f32.mxu0 0.0
    %1118 = vmatmul.mubr.f32.gmra.mrb[0].mxu0 %v1000
    %v1119 = vpop.f32.mrb[0].mxu0
    %v1120 = vadd.f32 0.0, %v1119
    %v1121 = vpop.f32.mrb[0].mxu0
    %1122 = vmatprep.mubr.f32.mxu0 0.0
    %1123 = vmatmul.mubr.f32.gmra.mrb[0].mxu0 %v1003
    %v1124 = vpop.f32.mrb[0].mxu0
    %v1125 = vadd.f32 0.0, %v1124
    %v1126 = vpop.f32.mrb[0].mxu0
    %1127 = vmatprep.mubr.f32.mxu0 0.0
    %1128 = vmatmul.mubr.f32.gmra.mrb[0].mxu0 %v1006
    %v1129 = vpop.f32.mrb[0].mxu0
    %v1130 = vadd.f32 0.0, %v1129
    %v1131 = vpop.f32.mrb[0].mxu0
    %1132 = vmatprep.mubr.f32.mxu0 0.0
    %1133 = vmatmul.mubr.f32.gmra.mrb[0].mxu0 %v1009
    %v1134 = vpop.f32.mrb[0].mxu0
    %v1135 = vadd.f32 0.0, %v1134
    %v1136 = vpop.f32.mrb[0].mxu0
    %1137 = vmatprep.mubr.f32.mxu0 0.0
    %1138 = vmatmul.mubr.f32.gmra.mrb[0].mxu0 %v1012
    %v1139 = vpop.f32.mrb[0].mxu0
    %v1140 = vadd.f32 0.0, %v1139
    %v1141 = vpop.f32.mrb[0].mxu0
    %1142 = vmatprep.mubr.f32.mxu0 0.0
    %1143 = vmatmul.mubr.f32.gmra.mrb[0].mxu0 %v1015
    %v1144 = vpop.f32.mrb[0].mxu0
    %v1145 = vadd.f32 0.0, %v1144
    %v1146 = vpop.f32.mrb[0].mxu0
    %1147 = vmatprep.mubr.f32.mxu0 0.0
    %1148 = vmatmul.mubr.f32.gmra.mrb[0].mxu0 %v1018
    %v1149 = vpop.f32.mrb[0].mxu0
    %v1150 = vadd.f32 0.0, %v1149
    %v1151 = vpop.f32.mrb[0].mxu0
    %1152 = vmatprep.mubr.f32.mxu0 0.0
    %1153 = vmatmul.mubr.f32.gmra.mrb[0].mxu0 %v1021
    %v1154 = vpop.f32.mrb[0].mxu0
    %v1155 = vadd.f32 0.0, %v1154
    %v1156 = vpop.f32.mrb[0].mxu0
    %1157 = vmatprep.mubr.f32.mxu0 0.0
    %1158 = vmatmul.mubr.f32.gmra.mrb[0].mxu0 %v1024
    %v1159 = vpop.f32.mrb[0].mxu0
    %v1160 = vadd.f32 0.0, %v1159
    %v1161 = vpop.f32.mrb[0].mxu0
    %1162 = vmatprep.mubr.f32.mxu0 0.0
    %1163 = vmatmul.mubr.f32.gmra.mrb[0].mxu0 %v1027
    %v1164 = vpop.f32.mrb[0].mxu0
    %v1165 = vadd.f32 0.0, %v1164
    %v1166 = vpop.f32.mrb[0].mxu0
    %1167 = vmatprep.mubr.f32.mxu0 0.0
    %1168 = vmatmul.mubr.f32.gmra.mrb[0].mxu0 %v1030
    %v1169 = vpop.f32.mrb[0].mxu0
    %v1170 = vadd.f32 0.0, %v1169
    %v1171 = vpop.f32.mrb[0].mxu0
    %1172 = vmatprep.mubr.f32.mxu0 0.0
    %1173 = vmatmul.mubr.f32.gmra.mrb[0].mxu0 %v1033
    %v1174 = vpop.f32.mrb[0].mxu0
    %v1175 = vadd.f32 0.0, %v1174
    %v1176 = vpop.f32.mrb[0].mxu0
    %1177 = vmatprep.mubr.f32.mxu0 0.0
    %1178 = vmatmul.mubr.f32.gmra.mrb[0].mxu0 %v1036
    %v1179 = vpop.f32.mrb[0].mxu0
    %v1180 = vadd.f32 0.0, %v1179
    %v1181 = vpop.f32.mrb[0].mxu0
    %1182 = vdwg.mxu0
    %1183 = vrot.lane.b32.xlu0 %v253, 64
    %v1184 = vpop.permute.xlu0 %1183
    %1185 = vrot.lane.b32.xlu0 %v258, 64
    %v1186 = vpop.permute.xlu0 %1185
    %v1189 = vmul.f32 %v1105, %v1184
    %v1190 = vmul.f32 %v1110, %v1184
    %v1191 = vmul.f32 %v1115, %v1184
    %v1192 = vmul.f32 %v1120, %v1184
    %v1193 = vmul.f32 %v1125, %v1184
    %v1194 = vmul.f32 %v1130, %v1184
    %v1195 = vmul.f32 %v1135, %v1184
    %v1196 = vmul.f32 %v1140, %v1184
    %v1197 = vmul.f32 %v1145, %v1186
    %v1198 = vmul.f32 %v1150, %v1186
    %v1199 = vmul.f32 %v1155, %v1186
    %v1200 = vmul.f32 %v1160, %v1186
    %v1201 = vmul.f32 %v1165, %v1186
    %v1202 = vmul.f32 %v1170, %v1186
    %v1203 = vmul.f32 %v1175, %v1186
    %v1204 = vmul.f32 %v1180, %v1186
    %v1205 = vsel %vm137, %v1189, 0.0
    %v1206 = vrot.slane %v1205, 4
    %v1207 = vadd.f32 %v1205, %v1206
    %v1208 = vrot.slane %v1207, 2
    %v1209 = vadd.f32 %v1207, %v1208
    %v1210 = vrot.slane %v1209, 1
    %v1211 = vadd.f32 %v1209, %v1210
    %v1212 = vsel %vm137, %v1190, 0.0
    %v1213 = vrot.slane %v1212, 4
    %v1214 = vadd.f32 %v1212, %v1213
    %v1215 = vrot.slane %v1214, 2
    %v1216 = vadd.f32 %v1214, %v1215
    %v1217 = vrot.slane %v1216, 1
    %v1218 = vadd.f32 %v1216, %v1217
    %v1219 = vsel %vm137, %v1191, 0.0
    %v1220 = vrot.slane %v1219, 4
    %v1221 = vadd.f32 %v1219, %v1220
    %v1222 = vrot.slane %v1221, 2
    %v1223 = vadd.f32 %v1221, %v1222
    %v1224 = vrot.slane %v1223, 1
    %v1225 = vadd.f32 %v1223, %v1224
    %v1226 = vsel %vm137, %v1192, 0.0
    %v1227 = vrot.slane %v1226, 4
    %v1228 = vadd.f32 %v1226, %v1227
    %v1229 = vrot.slane %v1228, 2
    %v1230 = vadd.f32 %v1228, %v1229
    %v1231 = vrot.slane %v1230, 1
    %v1232 = vadd.f32 %v1230, %v1231
    %v1233 = vsel %vm137, %v1193, 0.0
    %v1234 = vrot.slane %v1233, 4
    %v1235 = vadd.f32 %v1233, %v1234
    %v1236 = vrot.slane %v1235, 2
    %v1237 = vadd.f32 %v1235, %v1236
    %v1238 = vrot.slane %v1237, 1
    %v1239 = vadd.f32 %v1237, %v1238
    %v1240 = vsel %vm137, %v1194, 0.0
    %v1241 = vrot.slane %v1240, 4
    %v1242 = vadd.f32 %v1240, %v1241
    %v1243 = vrot.slane %v1242, 2
    %v1244 = vadd.f32 %v1242, %v1243
    %v1245 = vrot.slane %v1244, 1
    %v1246 = vadd.f32 %v1244, %v1245
    %v1247 = vsel %vm137, %v1195, 0.0
    %v1248 = vrot.slane %v1247, 4
    %v1249 = vadd.f32 %v1247, %v1248
    %v1250 = vrot.slane %v1249, 2
    %v1251 = vadd.f32 %v1249, %v1250
    %v1252 = vrot.slane %v1251, 1
    %v1253 = vadd.f32 %v1251, %v1252
    %v1254 = vsel %vm137, %v1196, 0.0
    %v1255 = vrot.slane %v1254, 4
    %v1256 = vadd.f32 %v1254, %v1255
    %v1257 = vrot.slane %v1256, 2
    %v1258 = vadd.f32 %v1256, %v1257
    %v1259 = vrot.slane %v1258, 1
    %v1260 = vadd.f32 %v1258, %v1259
    %v1261 = vsel %vm137, %v1197, 0.0
    %v1262 = vrot.slane %v1261, 4
    %v1263 = vadd.f32 %v1261, %v1262
    %v1264 = vrot.slane %v1263, 2
    %v1265 = vadd.f32 %v1263, %v1264
    %v1266 = vrot.slane %v1265, 1
    %v1267 = vadd.f32 %v1265, %v1266
    %v1268 = vsel %vm137, %v1198, 0.0
    %v1269 = vrot.slane %v1268, 4
    %v1270 = vadd.f32 %v1268, %v1269
    %v1271 = vrot.slane %v1270, 2
    %v1272 = vadd.f32 %v1270, %v1271
    %v1273 = vrot.slane %v1272, 1
    %v1274 = vadd.f32 %v1272, %v1273
    %v1275 = vsel %vm137, %v1199, 0.0
    %v1276 = vrot.slane %v1275, 4
    %v1277 = vadd.f32 %v1275, %v1276
    %v1278 = vrot.slane %v1277, 2
    %v1279 = vadd.f32 %v1277, %v1278
    %v1280 = vrot.slane %v1279, 1
    %v1281 = vadd.f32 %v1279, %v1280
    %v1282 = vsel %vm137, %v1200, 0.0
    %v1283 = vrot.slane %v1282, 4
    %v1284 = vadd.f32 %v1282, %v1283
    %v1285 = vrot.slane %v1284, 2
    %v1286 = vadd.f32 %v1284, %v1285
    %v1287 = vrot.slane %v1286, 1
    %v1288 = vadd.f32 %v1286, %v1287
    %v1289 = vsel %vm137, %v1201, 0.0
    %v1290 = vrot.slane %v1289, 4
    %v1291 = vadd.f32 %v1289, %v1290
    %v1292 = vrot.slane %v1291, 2
    %v1293 = vadd.f32 %v1291, %v1292
    %v1294 = vrot.slane %v1293, 1
    %v1295 = vadd.f32 %v1293, %v1294
    %v1296 = vsel %vm137, %v1202, 0.0
    %v1297 = vrot.slane %v1296, 4
    %v1298 = vadd.f32 %v1296, %v1297
    %v1299 = vrot.slane %v1298, 2
    %v1300 = vadd.f32 %v1298, %v1299
    %v1301 = vrot.slane %v1300, 1
    %v1302 = vadd.f32 %v1300, %v1301
    %v1303 = vsel %vm137, %v1203, 0.0
    %v1304 = vrot.slane %v1303, 4
    %v1305 = vadd.f32 %v1303, %v1304
    %v1306 = vrot.slane %v1305, 2
    %v1307 = vadd.f32 %v1305, %v1306
    %v1308 = vrot.slane %v1307, 1
    %v1309 = vadd.f32 %v1307, %v1308
    %v1310 = vsel %vm137, %v1204, 0.0
    %v1311 = vrot.slane %v1310, 4
    %v1312 = vadd.f32 %v1310, %v1311
    %v1313 = vrot.slane %v1312, 2
    %v1314 = vadd.f32 %v1312, %v1313
    %v1315 = vrot.slane %v1314, 1
    %v1316 = vadd.f32 %v1314, %v1315
    %v1317 = vld [vmem:[%s3] sm:$0xff]
    %v1318 = vld [vmem:[%s3 + $0x8] sm:$0xff]
    %v1319 = vld [vmem:[%s3 + $0x10] sm:$0xff]
    %v1320 = vld [vmem:[%s3 + $0x18] sm:$0xff]
    %vm1337 = vcmask 1041409
    %v1338 = vsel %vm1337, %v1218, %v1211
    %vm1339 = vcmask 1042434
    %v1340 = vsel %vm1339, %v1225, %v1338
    %vm1341 = vcmask 1043459
    %v1342 = vsel %vm1341, %v1232, %v1340
    %vm1343 = vcmask 1044484
    %v1344 = vsel %vm1343, %v1239, %v1342
    %vm1345 = vcmask 1045509
    %v1346 = vsel %vm1345, %v1246, %v1344
    %vm1347 = vcmask 1046534
    %v1348 = vsel %vm1347, %v1253, %v1346
    %vm1349 = vcmask 1047559
    %v1350 = vsel %vm1349, %v1260, %v1348
    %v1351 = vsel %vm1337, %v1274, %v1267
    %v1352 = vsel %vm1339, %v1281, %v1351
    %v1353 = vsel %vm1341, %v1288, %v1352
    %v1354 = vsel %vm1343, %v1295, %v1353
    %v1355 = vsel %vm1345, %v1302, %v1354
    %v1356 = vsel %vm1347, %v1309, %v1355
    %v1357 = vsel %vm1349, %v1316, %v1356
    %v1358 = vsel %vm137, %v1350, 0
    %v1360 = vsel %vm137, %v1357, 0
    %1362 = vmatprep.subr.mxu0 0.0
    %1363 = vmatpush1.msra.mxu0 %v1317
    %1364 = vmatprep.subr.mxu0 0.0
    %1365 = vmatpush1.msra.mxu0 %v1318
    %1366 = vmatprep.subr.mxu0 0.0
    %1367 = vmatpush1.msra.mxu0 %v1319
    %1368 = vmatprep.subr.mxu0 0.0
    %1369 = vmatpush1.msra.mxu0 %v1320
    %1370 = vmatprep.subr.mxu0 0.0
    %1371 = vmatpush1.msra.mxu0 0.0
    %1372 = vmatprep.subr.mxu0 0.0
    %1373 = vmatpush1.msra.mxu0 0.0
    %1374 = vmatprep.subr.mxu0 0.0
    %1375 = vmatpush1.msra.mxu0 0.0
    %1376 = vmatprep.subr.mxu0 0.0
    %1377 = vmatpush1.msra.mxu0 0.0
    %1378 = vmatprep.subr.mxu0 0.0
    %1379 = vmatpush1.msra.mxu0 0.0
    %1380 = vmatprep.subr.mxu0 0.0
    %1381 = vmatpush1.msra.mxu0 0.0
    %1382 = vmatprep.subr.mxu0 0.0
    %1383 = vmatpush1.msra.mxu0 0.0
    %1384 = vmatprep.subr.mxu0 0.0
    %1385 = vmatpush1.msra.mxu0 0.0
    %1386 = vmatprep.subr.mxu0 0.0
    %1387 = vmatpush1.msra.mxu0 0.0
    %1388 = vmatprep.subr.mxu0 0.0
    %1389 = vmatpush1.msra.mxu0 0.0
    %1390 = vmatprep.subr.mxu0 0.0
    %1391 = vmatpush1.msra.mxu0 0.0
    %1392 = vmatprep.subr.mxu0 0.0
    %1393 = vmatpush1.msra.mxu0 0.0
    %1394 = vmatprep.subr.mxu0 0.0
    %1395 = vmatpush1.msra.mxu0 0.0
    %1396 = vmatprep.subr.mxu0 0.0
    %1397 = vmatpush1.msra.mxu0 0.0
    %1398 = vmatprep.subr.mxu0 0.0
    %1399 = vmatpush1.msra.mxu0 0.0
    %1400 = vmatprep.subr.mxu0 0.0
    %1401 = vmatpush1.msra.mxu0 0.0
    %1402 = vmatprep.subr.mxu0 0.0
    %1403 = vmatpush1.msra.mxu0 0.0
    %1404 = vmatprep.subr.mxu0 0.0
    %1405 = vmatpush1.msra.mxu0 0.0
    %1406 = vmatprep.subr.mxu0 0.0
    %1407 = vmatpush1.msra.mxu0 0.0
    %1408 = vmatprep.subr.mxu0 0.0
    %1409 = vmatpush1.msra.mxu0 0.0
    %1410 = vmatprep.subr.mxu0 0.0
    %1411 = vmatpush1.msra.mxu0 0.0
    %1412 = vmatprep.subr.mxu0 0.0
    %1413 = vmatpush1.msra.mxu0 0.0
    %1414 = vmatprep.subr.mxu0 0.0
    %1415 = vmatpush1.msra.mxu0 0.0
    %1416 = vmatprep.subr.mxu0 0.0
    %1417 = vmatpush1.msra.mxu0 0.0
    %1418 = vmatprep.subr.mxu0 0.0
    %1419 = vmatpush1.msra.mxu0 0.0
    %1420 = vmatprep.subr.mxu0 0.0
    %1421 = vmatpush1.msra.mxu0 0.0
    %1422 = vmatprep.subr.mxu0 0.0
    %1423 = vmatpush1.msra.mxu0 0.0
    %1424 = vmatprep.subr.mxu0 0.0
    %1425 = vmatpush1.msra.mxu0 0.0
    %1426 = vmatprep.mubr.f32.mxu0 0.0
    %1427 = vmatmul.mubr.f32.gmra.mrb[0].mxu0 %v1358
    %v1428 = vpop.f32.mrb[0].mxu0
    %v1429 = vadd.f32 %v128, %v1428
    %v1430 = vpop.f32.mrb[0].mxu0
    %1431 = vmatprep.mubr.f32.mxu0 0.0
    %1432 = vmatmul.mubr.f32.gmra.mrb[0].mxu0 %v1360
    %v1433 = vpop.f32.mrb[0].mxu0
    %v1434 = vadd.f32 %v128, %v1433
    %v1435 = vpop.f32.mrb[0].mxu0
    %1436 = vdwg.mxu0
    %v1437 = vld [vmem:[#allocation5] sm:$0xff]
    %v1438 = vld [vmem:[#allocation5 + $0x8] sm:$0xff]
    %v1439 = vld [vmem:[#allocation5 + $0x10] sm:$0xff]
    %v1440 = vld [vmem:[#allocation5 + $0x18] sm:$0xff]
    %v1442 = vsel %vm137, %v114, 0
    %v1445 = vsel %vm137, %v115, 0
    %1447 = vmatprep.subr.mxu0 0.0
    %1448 = vmatpush1.msra.mxu0 %v1437
    %1449 = vmatprep.subr.mxu0 0.0
    %1450 = vmatpush1.msra.mxu0 %v1438
    %1451 = vmatprep.subr.mxu0 0.0
    %1452 = vmatpush1.msra.mxu0 %v1439
    %1453 = vmatprep.subr.mxu0 0.0
    %1454 = vmatpush1.msra.mxu0 %v1440
    %1455 = vmatprep.subr.mxu0 0.0
    %1456 = vmatpush1.msra.mxu0 0.0
    %1457 = vmatprep.subr.mxu0 0.0
    %1458 = vmatpush1.msra.mxu0 0.0
    %1459 = vmatprep.subr.mxu0 0.0
    %1460 = vmatpush1.msra.mxu0 0.0
    %1461 = vmatprep.subr.mxu0 0.0
    %1462 = vmatpush1.msra.mxu0 0.0
    %1463 = vmatprep.subr.mxu0 0.0
    %1464 = vmatpush1.msra.mxu0 0.0
    %1465 = vmatprep.subr.mxu0 0.0
    %1466 = vmatpush1.msra.mxu0 0.0
    %1467 = vmatprep.subr.mxu0 0.0
    %1468 = vmatpush1.msra.mxu0 0.0
    %1469 = vmatprep.subr.mxu0 0.0
    %1470 = vmatpush1.msra.mxu0 0.0
    %1471 = vmatprep.subr.mxu0 0.0
    %1472 = vmatpush1.msra.mxu0 0.0
    %1473 = vmatprep.subr.mxu0 0.0
    %1474 = vmatpush1.msra.mxu0 0.0
    %1475 = vmatprep.subr.mxu0 0.0
    %1476 = vmatpush1.msra.mxu0 0.0
    %1477 = vmatprep.subr.mxu0 0.0
    %1478 = vmatpush1.msra.mxu0 0.0
    %1479 = vmatprep.subr.mxu0 0.0
    %1480 = vmatpush1.msra.mxu0 0.0
    %1481 = vmatprep.subr.mxu0 0.0
    %1482 = vmatpush1.msra.mxu0 0.0
    %1483 = vmatprep.subr.mxu0 0.0
    %1484 = vmatpush1.msra.mxu0 0.0
    %1485 = vmatprep.subr.mxu0 0.0
    %1486 = vmatpush1.msra.mxu0 0.0
    %1487 = vmatprep.subr.mxu0 0.0
    %1488 = vmatpush1.msra.mxu0 0.0
    %1489 = vmatprep.subr.mxu0 0.0
    %1490 = vmatpush1.msra.mxu0 0.0
    %1491 = vmatprep.subr.mxu0 0.0
    %1492 = vmatpush1.msra.mxu0 0.0
    %1493 = vmatprep.subr.mxu0 0.0
    %1494 = vmatpush1.msra.mxu0 0.0
    %1495 = vmatprep.subr.mxu0 0.0
    %1496 = vmatpush1.msra.mxu0 0.0
    %1497 = vmatprep.subr.mxu0 0.0
    %1498 = vmatpush1.msra.mxu0 0.0
    %1499 = vmatprep.subr.mxu0 0.0
    %1500 = vmatpush1.msra.mxu0 0.0
    %1501 = vmatprep.subr.mxu0 0.0
    %1502 = vmatpush1.msra.mxu0 0.0
    %1503 = vmatprep.subr.mxu0 0.0
    %1504 = vmatpush1.msra.mxu0 0.0
    %1505 = vmatprep.subr.mxu0 0.0
    %1506 = vmatpush1.msra.mxu0 0.0
    %1507 = vmatprep.subr.mxu0 0.0
    %1508 = vmatpush1.msra.mxu0 0.0
    %1509 = vmatprep.subr.mxu0 0.0
    %1510 = vmatpush1.msra.mxu0 0.0
    %1511 = vmatprep.mubr.f32.mxu0 0.0
    %1512 = vmatmul.mubr.f32.gmra.mrb[0].mxu0 %v1442
    %v1513 = vpop.f32.mrb[0].mxu0
    %v1514 = vadd.f32 %v132, %v1513
    %v1515 = vpop.f32.mrb[0].mxu0
    %1516 = vmatprep.mubr.f32.mxu0 0.0
    %1517 = vmatmul.mubr.f32.gmra.mrb[0].mxu0 %v1445
    %v1518 = vpop.f32.mrb[0].mxu0
    %v1519 = vadd.f32 %v132, %v1518
    %v1520 = vpop.f32.mrb[0].mxu0
    %1521 = vdwg.mxu0
    %v1522 = vxor.u32 %v1514, 2147483648
    %v1523 = vxor.u32 %v1519, 2147483648
    %v1524 = vmul.f32 %v1522, 1.442695
    %v1525 = vpow.pop %v1524
    %v1526 = vmul.f32 %v1523, 1.442695
    %v1527 = vpow.pop %v1526
    %v1528 = vadd.f32 %v1525, 1.0
    %v1529 = vadd.f32 %v1527, 1.0
    %v1530 = vrcp.pop %v1528
    %v1531 = vmul.f32 1.0, %v1530
    %v1532 = vrcp.pop %v1529
    %v1533 = vmul.f32 1.0, %v1532
    %v1534 = vmul.f32 %v1531, %v1429
    %v1535 = vmul.f32 %v1533, %v1434
    %v1536 = vadd.f32 %v1534, %v114
    %v1537 = vadd.f32 %v1535, %v115
    %v1538 = vld [vmem:[#allocation7] sm:$0xff]
    %v1539 = vld [vmem:[#allocation7 + $0x8] sm:$0xff]
    %v1540 = vld [vmem:[#allocation7 + $0x10] sm:$0xff]
    %v1541 = vld [vmem:[#allocation7 + $0x18] sm:$0xff]
    %v1543 = vsel %vm137, %v1536, 0
    %v1546 = vsel %vm137, %v1537, 0
    %1548 = vmatprep.subr.mxu0 0.0
    %1549 = vmatpush1.msra.mxu0 %v1538
    %1550 = vmatprep.subr.mxu0 0.0
    %1551 = vmatpush1.msra.mxu0 %v1539
    %1552 = vmatprep.subr.mxu0 0.0
    %1553 = vmatpush1.msra.mxu0 %v1540
    %1554 = vmatprep.subr.mxu0 0.0
    %1555 = vmatpush1.msra.mxu0 %v1541
    %1556 = vmatprep.subr.mxu0 0.0
    %1557 = vmatpush1.msra.mxu0 0.0
    %1558 = vmatprep.subr.mxu0 0.0
    %1559 = vmatpush1.msra.mxu0 0.0
    %1560 = vmatprep.subr.mxu0 0.0
    %1561 = vmatpush1.msra.mxu0 0.0
    %1562 = vmatprep.subr.mxu0 0.0
    %1563 = vmatpush1.msra.mxu0 0.0
    %1564 = vmatprep.subr.mxu0 0.0
    %1565 = vmatpush1.msra.mxu0 0.0
    %1566 = vmatprep.subr.mxu0 0.0
    %1567 = vmatpush1.msra.mxu0 0.0
    %1568 = vmatprep.subr.mxu0 0.0
    %1569 = vmatpush1.msra.mxu0 0.0
    %1570 = vmatprep.subr.mxu0 0.0
    %1571 = vmatpush1.msra.mxu0 0.0
    %1572 = vmatprep.subr.mxu0 0.0
    %1573 = vmatpush1.msra.mxu0 0.0
    %1574 = vmatprep.subr.mxu0 0.0
    %1575 = vmatpush1.msra.mxu0 0.0
    %1576 = vmatprep.subr.mxu0 0.0
    %1577 = vmatpush1.msra.mxu0 0.0
    %1578 = vmatprep.subr.mxu0 0.0
    %1579 = vmatpush1.msra.mxu0 0.0
    %1580 = vmatprep.subr.mxu0 0.0
    %1581 = vmatpush1.msra.mxu0 0.0
    %1582 = vmatprep.subr.mxu0 0.0
    %1583 = vmatpush1.msra.mxu0 0.0
    %1584 = vmatprep.subr.mxu0 0.0
    %1585 = vmatpush1.msra.mxu0 0.0
    %1586 = vmatprep.subr.mxu0 0.0
    %1587 = vmatpush1.msra.mxu0 0.0
    %1588 = vmatprep.subr.mxu0 0.0
    %1589 = vmatpush1.msra.mxu0 0.0
    %1590 = vmatprep.subr.mxu0 0.0
    %1591 = vmatpush1.msra.mxu0 0.0
    %1592 = vmatprep.subr.mxu0 0.0
    %1593 = vmatpush1.msra.mxu0 0.0
    %1594 = vmatprep.subr.mxu0 0.0
    %1595 = vmatpush1.msra.mxu0 0.0
    %1596 = vmatprep.subr.mxu0 0.0
    %1597 = vmatpush1.msra.mxu0 0.0
    %1598 = vmatprep.subr.mxu0 0.0
    %1599 = vmatpush1.msra.mxu0 0.0
    %1600 = vmatprep.subr.mxu0 0.0
    %1601 = vmatpush1.msra.mxu0 0.0
    %1602 = vmatprep.subr.mxu0 0.0
    %1603 = vmatpush1.msra.mxu0 0.0
    %1604 = vmatprep.subr.mxu0 0.0
    %1605 = vmatpush1.msra.mxu0 0.0
    %1606 = vmatprep.subr.mxu0 0.0
    %1607 = vmatpush1.msra.mxu0 0.0
    %1608 = vmatprep.subr.mxu0 0.0
    %1609 = vmatpush1.msra.mxu0 0.0
    %1610 = vmatprep.subr.mxu0 0.0
    %1611 = vmatpush1.msra.mxu0 0.0
    %1612 = vmatprep.mubr.f32.mxu0 0.0
    %1613 = vmatmul.mubr.f32.gmra.mrb[0].mxu0 %v1543
    %v1614 = vpop.f32.mrb[0].mxu0
    %v1615 = vadd.f32 %v136, %v1614
    %v1616 = vpop.f32.mrb[0].mxu0
    %1617 = vmatprep.mubr.f32.mxu0 0.0
    %1618 = vmatmul.mubr.f32.gmra.mrb[0].mxu0 %v1546
    %v1619 = vpop.f32.mrb[0].mxu0
    %v1620 = vadd.f32 %v136, %v1619
    %v1621 = vpop.f32.mrb[0].mxu0
    %1622 = vdwg.mxu0
    %v1623 = vxor.u32 %v1615, 2147483648
    %v1624 = vxor.u32 %v1620, 2147483648
    %v1625 = vmul.f32 %v1623, 1.442695
    %v1626 = vpow.pop %v1625
    %v1627 = vmul.f32 %v1624, 1.442695
    %v1628 = vpow.pop %v1627
    %v1629 = vadd.f32 %v1626, 1.0
    %v1630 = vadd.f32 %v1628, 1.0
    %v1631 = vrcp.pop %v1629
    %v1632 = vmul.f32 1.0, %v1631
    %v1633 = vrcp.pop %v1630
    %v1634 = vmul.f32 1.0, %v1633
    %v1635 = vsel %vm137, %v1632, 0.0
    %1636 = vadd.xlane.f32.xlu0 %v1635
    %v1637 = vpop.xlane.xlu0 %1636
    %v1638 = vsel %vm137, %v1634, 0.0
    %1639 = vadd.xlane.f32.xlu0 %v1638
    %v1640 = vpop.xlane.xlu0 %1639
    %v1641 = vmul.f32 %v1637, %v144
    %v1642 = vmul.f32 %v1640, %v144
    %v1643 = vsub.f32 %v1632, %v1641
    %v1644 = vsub.f32 %v1634, %v1642
    %v1645 = vmul.f32 %v1643, %v1643
    %v1646 = vmul.f32 %v1644, %v1644
    %v1647 = vsel %vm137, %v1645, 0.0
    %1648 = vadd.xlane.f32.xlu0 %v1647
    %v1649 = vpop.xlane.xlu0 %1648
    %v1650 = vsel %vm137, %v1646, 0.0
    %1651 = vadd.xlane.f32.xlu0 %v1650
    %v1652 = vpop.xlane.xlu0 %1651
    %v1653 = vmul.f32 %v1649, %v144
    %v1654 = vmul.f32 %v1652, %v144
    %v1655 = vadd.f32 %v1653, 1e-05
    %v1656 = vadd.f32 %v1654, 1e-05
    %v1657 = vrsqrt.pop %v1655
    %v1658 = vrsqrt.pop %v1656
    %v1659 = vmul.f32 %v1643, %v1657
    %v1660 = vmul.f32 %v1644, %v1658
    %v1661 = vmul.f32 %v1659, %v120
    %v1662 = vmul.f32 %v1660, %v120
    %v1663 = vadd.f32 %v1661, %v124
    %v1664 = vadd.f32 %v1662, %v124
    %v1665 = vmul.f32 %v1536, %v1663
    %v1666 = vmul.f32 %v1537, %v1664
    %v1667 = vadd.f32 %v1665, %v1536
    %v1668 = vadd.f32 %v1666, %v1537
    %1669 = vst.msk [vmem:[#allocation13] sm:$0xff] %vm137, %v1667
    %1670 = vst.msk [vmem:[#allocation13 + $0x8] sm:$0xff] %vm137, %v1668
    // Predicated region
    $region66: #{rg_transformer.1} parent=1 // pred_check
      _
    $region67: #{rg_transformer.1} parent=1 // pred_check_branch
      %1672 = sbr.rel (0) target = $region69
    $region68: #{rg_transformer.1} parent=1 // pred_region
      %s1674 = ssub.s32 256, 256
      %1675 = vsyncadd [#allocation4], %s1674
      %s1676 = sshll.u32 [#allocation13], 4
      %s1677 = int_to_ptr.vmem [resolvable:$true] %s1676
      %1682 = dma.vmem_to_hbm [thread:$0]  %s1677, 256, %s10, [#allocation4], 128, 128, 8
    $region69: #{rg_transformer.1} parent=1 // pred_fallthru
      _
    // Predicated region
    $region70: #{rg_transformer.1} parent=1 // pred_check
      _
    $region71: #{rg_transformer.1} parent=1 // pred_check_branch
      %1684 = sbr.rel (0) target = $region73
    $region72: #{rg_transformer.1} parent=1 // pred_region
      %1685 = dma.done [#allocation4], 256
    $region73: #{rg_transformer.1} parent=1 // pred_fallthru
      _
    %1686 = vsyncpa [#allocation3], 1
    %1687 = vsyncpa [#allocation6], 1
    %1688 = vsyncpa [#allocation9], 1
    %1689 = vsyncpa [#allocation12], 1
    %1690 = vsyncpa [#allocation4], 1

</llo_original>
